<compile_context>
chip_gen: v7x
topology: tpu7x:2x2x1
jax: 0.10.0
libtpu: 0.0.40
codegen_flags: <defaults>
</compile_context>

<pallas_src>
import jax
import jax.numpy as jnp
from jax.experimental import pallas as pl
from jax.experimental.pallas import tpu as pltpu

EMB = 512          # pre-trained embedding size (FaceNet)
NUM_CLASSES = 3
LANE = 128         # lane-padded head width (one full lane tile)
NEG_BIG = -1e30    # bias for padded classes -> exp() == 0 after softmax


def _round_up(x, m):
    return ((x + m - 1) // m) * m


def combined_kernel(x_ref, w1_ref, b1_ref, w2_ref, b2_ref, out_ref, acc_ref):
    # Grid: (i over batch tiles [parallel], k over D_in tiles [arbitrary]).
    # x_ref:   (BM, TK)    bf16 flattened-image tile
    # w1_ref:  (TK, EMB)   bf16 backbone weight tile (streamed, double-buffered)
    # b1_ref:  (1, EMB)    f32
    # w2_ref:  (EMB, LANE) f32 head weight, zero-padded past NUM_CLASSES
    # b2_ref:  (1, LANE)   f32 head bias, NEG_BIG past NUM_CLASSES
    # out_ref: (BM, LANE)  f32 softmax probabilities (lane-dense store)
    # acc_ref: (BM, EMB)   f32 feature accumulator (VMEM scratch)
    k = pl.program_id(1)

    @pl.when(k == 0)
    def _():
        acc_ref[...] = jnp.zeros_like(acc_ref)

    acc_ref[...] += jnp.dot(x_ref[...], w1_ref[...],
                            preferred_element_type=jnp.float32)

    @pl.when(k == pl.num_programs(1) - 1)
    def _():
        feat = acc_ref[...] + b1_ref[...]                        # (BM, 512) f32
        logits = jnp.dot(feat, w2_ref[...],
                         preferred_element_type=jnp.float32) + b2_ref[...]
        # Numerically stable softmax over the lane-padded logits; padded
        # classes have logit -1e30 so they contribute exactly 0.
        m = jnp.max(logits, axis=1, keepdims=True)
        e = jnp.exp(logits - m)
        probs = e * pl.reciprocal(jnp.sum(e, axis=1, keepdims=True),
                                  approx=False)
        out_ref[...] = probs                                     # full 128 lanes


def combined_model_forward(x_nchw, w1, b1, w2_t, b2, *, tk=4096, bm=128):
    """x_nchw: [B, C, H, W] float32. Returns [B, 3] softmax probabilities."""
    B = x_nchw.shape[0]
    x2d = x_nchw.reshape(B, -1).astype(jnp.float32)   # glue: flatten NCHW
    D_in = x2d.shape[1]

    # --- padding / tiling choices -------------------------------------------
    B_pad = _round_up(B, 8)                 # sublane multiple
    BM = min(bm, B_pad)                     # batch tile
    B_pad = _round_up(B_pad, BM)
    TK = min(tk, _round_up(D_in, LANE))     # K tile (multiple of 128)
    D_pad = _round_up(D_in, TK)

    # --- host-side padding / dtype prep -------------------------------------
    x_p = jnp.zeros((B_pad, D_pad), jnp.bfloat16).at[:B, :D_in].set(
        x2d.astype(jnp.bfloat16))
    w1_p = jnp.zeros((D_pad, EMB), jnp.bfloat16).at[:D_in, :].set(
        w1.astype(jnp.bfloat16))
    b1_p = b1.reshape(1, EMB).astype(jnp.float32)
    # Lane-dense head: zero-pad w2 to 128 output lanes; padded biases get a
    # huge negative value so softmax of the padded classes is exactly 0.
    w2_p = jnp.zeros((EMB, LANE), jnp.float32).at[:, :NUM_CLASSES].set(
        w2_t.astype(jnp.float32))
    b2_p = jnp.full((1, LANE), NEG_BIG, jnp.float32).at[:, :NUM_CLASSES].set(
        b2.reshape(1, NUM_CLASSES).astype(jnp.float32))

    grid = (B_pad // BM, D_pad // TK)

    out = pl.pallas_call(
        combined_kernel,
        out_shape=jax.ShapeDtypeStruct((B_pad, LANE), jnp.float32),
        grid_spec=pltpu.PrefetchScalarGridSpec(
            num_scalar_prefetch=0,
            grid=grid,
            in_specs=[
                pl.BlockSpec((BM, TK), lambda i, k: (i, k)),     # x
                pl.BlockSpec((TK, EMB), lambda i, k: (k, 0)),    # w1 (streamed)
                pl.BlockSpec((1, EMB), lambda i, k: (0, 0)),     # b1 (invariant)
                pl.BlockSpec((EMB, LANE), lambda i, k: (0, 0)),  # w2 (invariant)
                pl.BlockSpec((1, LANE), lambda i, k: (0, 0)),    # b2 (invariant)
            ],
            out_specs=pl.BlockSpec((BM, LANE), lambda i, k: (i, 0)),
            scratch_shapes=[pltpu.VMEM((BM, EMB), jnp.float32)],
        ),
        compiler_params=pltpu.CompilerParams(
            dimension_semantics=("parallel", "arbitrary"),
            vmem_limit_bytes=32 << 20,
        ),
    )(x_p, w1_p, b1_p, w2_p, b2_p)

    return out[:B, :NUM_CLASSES]


def init_params(key, d_in):
    k1, k2, k3, k4 = jax.random.split(key, 4)
    # Synthetic backbone (stand-in for pre_trained_model): d_in -> 512
    w1 = jax.random.normal(k1, (d_in, EMB), jnp.float32) * 0.02
    b1 = jax.random.normal(k2, (1, EMB), jnp.float32) * 0.01
    # new_layer = nn.Linear(512, 3): torch weight [3, 512]; store transposed.
    w2_torch = jax.random.normal(k3, (NUM_CLASSES, EMB), jnp.float32) * 0.05
    b2 = jax.random.normal(k4, (1, NUM_CLASSES), jnp.float32) * 0.01
    return w1, b1, w2_torch.T, b2


if __name__ == "__main__":
    key = jax.random.PRNGKey(0)
    kx, kp = jax.random.split(key)

    # Small image-like input consistent with an NCHW conv backbone.
    B, C, H, W = 2, 4, 16, 16
    x = jax.random.normal(kx, (B, C, H, W), jnp.float32)

    w1, b1, w2_t, b2 = init_params(kp, C * H * W)

    probs = combined_model_forward(x, w1, b1, w2_t, b2)
    probs = jax.block_until_ready(probs)

    # Sanity: shape and rows sum to 1 (softmax over dim=1)
    assert probs.shape == (B, NUM_CLASSES)
    assert jnp.allclose(jnp.sum(probs, axis=1), 1.0, atol=1e-5)

    # Reference in plain JAX (matching the kernel's bf16 rounding of x / w1).
    x2d = x.reshape(B, -1)
    xb = x2d.astype(jnp.bfloat16).astype(jnp.float32)
    wb = w1.astype(jnp.bfloat16).astype(jnp.float32)
    logits_ref = (xb @ wb + b1) @ w2_t + b2
    probs_ref = jax.nn.softmax(logits_ref, axis=1)
    assert jnp.allclose(probs, probs_ref, atol=2e-3), float(
        jnp.max(jnp.abs(probs - probs_ref)))

    print("KERNEL_OK")
</pallas_src>

<mosaic_0001>
module attributes {stable_mosaic.version = 11 : i64} {
  func.func @combined_kernel(%arg0: i32, %arg1: i32, %arg2: memref<8x1024xbf16, #tpu.memory_space<vmem>>, %arg3: memref<1024x512xbf16, #tpu.memory_space<vmem>>, %arg4: memref<1x512xf32, #tpu.memory_space<vmem>>, %arg5: memref<512x128xf32, #tpu.memory_space<vmem>>, %arg6: memref<1x128xf32, #tpu.memory_space<vmem>>, %arg7: memref<8x128xf32, #tpu.memory_space<vmem>>, %arg8: memref<8x512xf32, #tpu.memory_space<vmem>>) attributes {dimension_semantics = [#tpu.dimension_semantics<parallel>, #tpu.dimension_semantics<arbitrary>], iteration_bounds = array<i64: 1, 1>, scalar_prefetch = 0 : i64, scratch_operands = 1 : i64, tpu.core_type = #tpu.core_type<tc>, window_params = [{transform_indices = @transform_0, window_bounds = array<i64: 8, 1024>}, {transform_indices = @transform_1, window_bounds = array<i64: 1024, 512>}, {pipeline_mode = #tpu.pipeline_mode<synchronous>, transform_indices = @transform_2, window_bounds = array<i64: 1, 512>}, {pipeline_mode = #tpu.pipeline_mode<synchronous>, transform_indices = @transform_3, window_bounds = array<i64: 512, 128>}, {pipeline_mode = #tpu.pipeline_mode<synchronous>, transform_indices = @transform_4, window_bounds = array<i64: 1, 128>}, {transform_indices = @transform_5, window_bounds = array<i64: 8, 128>}]} {
    %c0_i32 = arith.constant 0 : i32
    %0 = arith.cmpi eq, %arg1, %c0_i32 : i32
    %1 = arith.extui %0 : i1 to i32
    %c0_i32_0 = arith.constant 0 : i32
    %2 = arith.cmpi ne, %1, %c0_i32_0 : i32
    scf.if %2 {
      %cst_10 = arith.constant 0.000000e+00 : f32
      %12 = vector.broadcast %cst_10 : f32 to vector<8x512xf32>
      %c0_11 = arith.constant 0 : index
      %c0_12 = arith.constant 0 : index
      %13 = vector.load %arg8[%c0_11, %c0_12] : memref<8x512xf32, #tpu.memory_space<vmem>>, vector<8x512xf32>
      tpu.vector_store %arg8[%c0_11, %c0_12], %12 {strides = array<i32>} : memref<8x512xf32, #tpu.memory_space<vmem>>, vector<8x512xf32>,
    } else {
    }
    %c0 = arith.constant 0 : index
    %c0_1 = arith.constant 0 : index
    %3 = vector.load %arg8[%c0, %c0_1] : memref<8x512xf32, #tpu.memory_space<vmem>>, vector<8x512xf32>
    %c0_2 = arith.constant 0 : index
    %c0_3 = arith.constant 0 : index
    %4 = vector.load %arg2[%c0_2, %c0_3] : memref<8x1024xbf16, #tpu.memory_space<vmem>>, vector<8x1024xbf16>
    %c0_4 = arith.constant 0 : index
    %c0_5 = arith.constant 0 : index
    %5 = vector.load %arg3[%c0_4, %c0_5] : memref<1024x512xbf16, #tpu.memory_space<vmem>>, vector<1024x512xbf16>
    %cst = arith.constant dense<0.000000e+00> : vector<8x512xf32>
    %6 = tpu.matmul %4, %5, %cst {dimension_numbers = #tpu.dot_dimension_numbers<[1], [0], [0], [1], [0, 0, 1, 1], [], []>} : vector<8x1024xbf16>, vector<1024x512xbf16>, vector<8x512xf32> -> vector<8x512xf32>
    %7 = arith.addf %3, %6 : vector<8x512xf32>
    %c0_6 = arith.constant 0 : index
    %c0_7 = arith.constant 0 : index
    %8 = vector.load %arg8[%c0_6, %c0_7] : memref<8x512xf32, #tpu.memory_space<vmem>>, vector<8x512xf32>
    tpu.vector_store %arg8[%c0_6, %c0_7], %7 {strides = array<i32>} : memref<8x512xf32, #tpu.memory_space<vmem>>, vector<8x512xf32>,
    %c0_i32_8 = arith.constant 0 : i32
    %9 = arith.cmpi eq, %arg1, %c0_i32_8 : i32
    %10 = arith.extui %9 : i1 to i32
    %c0_i32_9 = arith.constant 0 : i32
    %11 = arith.cmpi ne, %10, %c0_i32_9 : i32
    scf.if %11 {
      %c0_10 = arith.constant 0 : index
      %c0_11 = arith.constant 0 : index
      %12 = vector.load %arg8[%c0_10, %c0_11] : memref<8x512xf32, #tpu.memory_space<vmem>>, vector<8x512xf32>
      %c0_12 = arith.constant 0 : index
      %c0_13 = arith.constant 0 : index
      %13 = vector.load %arg4[%c0_12, %c0_13] : memref<1x512xf32, #tpu.memory_space<vmem>>, vector<1x512xf32>
      %14 = vector.broadcast %13 : vector<1x512xf32> to vector<8x512xf32>
      %15 = arith.addf %12, %14 : vector<8x512xf32>
      %c0_14 = arith.constant 0 : index
      %c0_15 = arith.constant 0 : index
      %16 = vector.load %arg5[%c0_14, %c0_15] : memref<512x128xf32, #tpu.memory_space<vmem>>, vector<512x128xf32>
      %cst_16 = arith.constant dense<0.000000e+00> : vector<8x128xf32>
      %17 = tpu.matmul %15, %16, %cst_16 {dimension_numbers = #tpu.dot_dimension_numbers<[1], [0], [0], [1], [0, 0, 1, 1], [], []>} : vector<8x512xf32>, vector<512x128xf32>, vector<8x128xf32> -> vector<8x128xf32>
      %c0_17 = arith.constant 0 : index
      %c0_18 = arith.constant 0 : index
      %18 = vector.load %arg6[%c0_17, %c0_18] : memref<1x128xf32, #tpu.memory_space<vmem>>, vector<1x128xf32>
      %19 = vector.broadcast %18 : vector<1x128xf32> to vector<8x128xf32>
      %20 = arith.addf %17, %19 : vector<8x128xf32>
      %cst_19 = arith.constant dense<0xFF800000> : vector<8xf32>
      %21 = vector.multi_reduction <maximumf>, %20, %cst_19 [1] : vector<8x128xf32> to vector<8xf32>
      %22 = vector.shape_cast %21 : vector<8xf32> to vector<8x1xf32>
      %23 = vector.broadcast %22 : vector<8x1xf32> to vector<8x128xf32>
      %24 = arith.subf %20, %23 : vector<8x128xf32>
      %25 = math.exp %24 : vector<8x128xf32>
      %cst_20 = arith.constant dense<0.000000e+00> : vector<8xf32>
      %26 = vector.multi_reduction <add>, %25, %cst_20 [1] : vector<8x128xf32> to vector<8xf32>
      %27 = vector.shape_cast %26 : vector<8xf32> to vector<8x1xf32>
      %28 = tpu.reciprocal %27 : vector<8x1xf32> -> vector<8x1xf32>
      %29 = vector.broadcast %28 : vector<8x1xf32> to vector<8x128xf32>
      %30 = arith.mulf %25, %29 : vector<8x128xf32>
      %c0_21 = arith.constant 0 : index
      %c0_22 = arith.constant 0 : index
      %31 = vector.load %arg7[%c0_21, %c0_22] : memref<8x128xf32, #tpu.memory_space<vmem>>, vector<8x128xf32>
      tpu.vector_store %arg7[%c0_21, %c0_22], %30 {strides = array<i32>} : memref<8x128xf32, #tpu.memory_space<vmem>>, vector<8x128xf32>,
    } else {
    }
    return
  }
  func.func @transform_0(%arg0: i32, %arg1: i32) -> (i32, i32) {
    %c0_i32 = arith.constant 0 : i32
    return %arg0, %arg1 : i32, i32
  }
  func.func @transform_1(%arg0: i32, %arg1: i32) -> (i32, i32) {
    %c0_i32 = arith.constant 0 : i32
    %c0_i32_0 = arith.constant 0 : i32
    return %arg1, %c0_i32 : i32, i32
  }
  func.func @transform_2(%arg0: i32, %arg1: i32) -> (i32, i32) {
    %c0_i32 = arith.constant 0 : i32
    %c0_i32_0 = arith.constant 0 : i32
    %c0_i32_1 = arith.constant 0 : i32
    return %c0_i32, %c0_i32_0 : i32, i32
  }
  func.func @transform_3(%arg0: i32, %arg1: i32) -> (i32, i32) {
    %c0_i32 = arith.constant 0 : i32
    %c0_i32_0 = arith.constant 0 : i32
    %c0_i32_1 = arith.constant 0 : i32
    return %c0_i32, %c0_i32_0 : i32, i32
  }
  func.func @transform_4(%arg0: i32, %arg1: i32) -> (i32, i32) {
    %c0_i32 = arith.constant 0 : i32
    %c0_i32_0 = arith.constant 0 : i32
    %c0_i32_1 = arith.constant 0 : i32
    return %c0_i32, %c0_i32_0 : i32, i32
  }
  func.func @transform_5(%arg0: i32, %arg1: i32) -> (i32, i32) {
    %c0_i32 = arith.constant 0 : i32
    %c0_i32_0 = arith.constant 0 : i32
    return %arg0, %c0_i32 : i32, i32
  }
}

</mosaic_0001>

<llo_original>
// kernel: tpu_custom_call.1
$region0: #{tpu_custom_call.1}
  #allocation0 [shape = 'u32[]', space=smem, size = 0x4, offset = 0x4, fixed_abs, tag = 'smem constant byte address 0x4 - core index']
  #allocation1 [shape = 'u32[144,128]{1,0:T(1,128)}', space=vmem, size = 0x12000, scoped, tag = 'internal scratch']
  #allocation2 [shape = 'f32[8,512]{1,0:T(8,128)}', space=vmem, size = 0x4000, scoped, tag = 'scratch operand']
  %s0 = inlined_call_operand.hbm [shape: bf16[8,1024], index: 0, kind: input, shape index: {}]
  %s1 = inlined_call_operand.hbm [shape: bf16[1024,512], index: 1, kind: input, shape index: {}]
  %s2 = inlined_call_operand.vmem [shape: f32[1,512], index: 2, kind: input, shape index: {}]
  %s3 = inlined_call_operand.hbm [shape: f32[512,128], index: 3, kind: input, shape index: {}]
  %s4 = inlined_call_operand.vmem [shape: f32[1,128], index: 4, kind: input, shape index: {}]
  %s5 = inlined_call_operand.hbm [shape: f32[8,128], index: 5, kind: output, shape index: {}]
  %s6 = sld [smem:[#allocation0]]
  $region50: #{tpu_custom_call.1} parent=0
    _
  %s8 = ssub.s32 1, %s6
  %s9 = scalar_select 0, %s8, %s6
  $region1: #{tpu_custom_call.1} parent=0
    #allocation3 [shape = 'u8[16384]{0}', space=vmem, size = 0x4000, scoped, tag = 'input window, operand 0, single buffered']
    #allocation4 [shape = 's32[1]{0}', space=sflag, size = 0x4, scoped, tag = 'scoped memory for tpu_custom_call.1']
    #allocation5 [shape = 's32[1]{0}', space=sflag, size = 0x4, scoped, tag = 'scoped memory for tpu_custom_call.1']
    #allocation6 [shape = 'u8[1048576]{0}', space=vmem, size = 0x100000, scoped, tag = 'input window, operand 1, single buffered']
    #allocation7 [shape = 's32[1]{0}', space=sflag, size = 0x4, scoped, tag = 'scoped memory for tpu_custom_call.1']
    #allocation8 [shape = 'u8[262144]{0}', space=vmem, size = 0x40000, scoped, tag = 'input window, operand 3, single buffered']
    #allocation9 [shape = 'u8[4096]{0}', space=vmem, size = 0x1000, scoped, tag = 'output window, operand 0, single buffered']
    %10 = vsyncpa [#allocation4], 0
    %11 = vsyncpa [#allocation7], 0
    %12 = vsyncpa [#allocation5], 0
    // Predicated region
    $region2: #{tpu_custom_call.1} parent=1 // pred_check
      _
    $region3: #{tpu_custom_call.1} parent=1 // pred_check_branch
      %14 = sbr.rel (0) target = $region5
    $region4: #{tpu_custom_call.1} parent=1 // pred_region
      %s16 = ssub.s32 512, 512
      %17 = vsyncadd [#allocation4], %s16
      %s19 = sshll.u32 [#allocation3], 4
      %s20 = int_to_ptr.vmem [resolvable:$true] %s19
      %22 = dma.hbm_to_vmem [thread:$0]  %s0, 512, %s20, [#allocation4]
    $region5: #{tpu_custom_call.1} parent=1 // pred_fallthru
      _
    // Predicated region
    $region6: #{tpu_custom_call.1} parent=1 // pred_check
      _
    $region7: #{tpu_custom_call.1} parent=1 // pred_check_branch
      %24 = sbr.rel (0) target = $region9
    $region8: #{tpu_custom_call.1} parent=1 // pred_region
      %s26 = ssub.s32 32768, 32768
      %27 = vsyncadd [#allocation7], %s26
      %s28 = sshll.u32 [#allocation6], 4
      %s29 = int_to_ptr.vmem [resolvable:$true] %s28
      %34 = dma.hbm_to_vmem [thread:$0]  %s1, 32768, %s29, [#allocation7], 256, 256, 16
    $region9: #{tpu_custom_call.1} parent=1 // pred_fallthru
      _
    // Predicated region
    $region10: #{tpu_custom_call.1} parent=1 // pred_check
      _
    $region11: #{tpu_custom_call.1} parent=1 // pred_check_branch
      %36 = sbr.rel (0) target = $region13
    $region12: #{tpu_custom_call.1} parent=1 // pred_region
      _
    $region13: #{tpu_custom_call.1} parent=1 // pred_fallthru
      _
    // Predicated region
    $region14: #{tpu_custom_call.1} parent=1 // pred_check
      _
    $region15: #{tpu_custom_call.1} parent=1 // pred_check_branch
      %38 = sbr.rel (0) target = $region17
    $region16: #{tpu_custom_call.1} parent=1 // pred_region
      %s40 = ssub.s32 8192, 8192
      %41 = vsyncadd [#allocation7], %s40
      %s42 = sshll.u32 [#allocation8], 4
      %s43 = int_to_ptr.vmem [resolvable:$true] %s42
      %48 = dma.hbm_to_vmem [thread:$0]  %s3, 8192, %s43, [#allocation7], 128, 128, 8
    $region17: #{tpu_custom_call.1} parent=1 // pred_fallthru
      _
    // Predicated region
    $region18: #{tpu_custom_call.1} parent=1 // pred_check
      _
    $region19: #{tpu_custom_call.1} parent=1 // pred_check_branch
      %50 = sbr.rel (0) target = $region21
    $region20: #{tpu_custom_call.1} parent=1 // pred_region
      _
    $region21: #{tpu_custom_call.1} parent=1 // pred_fallthru
      _
    // Predicated region
    $region22: #{tpu_custom_call.1} parent=1 // pred_check
      _
    $region23: #{tpu_custom_call.1} parent=1 // pred_check_branch
      %52 = sbr.rel (0) target = $region25
    $region24: #{tpu_custom_call.1} parent=1 // pred_region
      %53 = dma.done [#allocation4], 512
    $region25: #{tpu_custom_call.1} parent=1 // pred_fallthru
      _
    // Predicated region
    $region26: #{tpu_custom_call.1} parent=1 // pred_check
      _
    $region27: #{tpu_custom_call.1} parent=1 // pred_check_branch
      %55 = sbr.rel (0) target = $region29
    $region28: #{tpu_custom_call.1} parent=1 // pred_region
      %56 = dma.done [#allocation7], 32768
    $region29: #{tpu_custom_call.1} parent=1 // pred_fallthru
      _
    // Predicated region
    $region30: #{tpu_custom_call.1} parent=1 // pred_check
      _
    $region31: #{tpu_custom_call.1} parent=1 // pred_check_branch
      %58 = sbr.rel (0) target = $region33
    $region32: #{tpu_custom_call.1} parent=1 // pred_region
      %59 = dma.done [#allocation7], 8192
    $region33: #{tpu_custom_call.1} parent=1 // pred_fallthru
      _
    %p60 = scmp.eq.s32.totalorder 0, 0
    // Predicated region
    $region34: #{tpu_custom_call.1} parent=1 // pred_check
      %p61 = pneg %p60
    $region35: #{tpu_custom_call.1} parent=1 // pred_check_branch
      %63 = sbr.rel (%p61) target = $region37
    $region36: #{tpu_custom_call.1} parent=1 // pred_region
      %64 = vst [vmem:[#allocation2] sm:$0xff] 0.0
      %65 = vst [vmem:[#allocation2 + $0x8] sm:$0xff] 0.0
      %66 = vst [vmem:[#allocation2 + $0x10] sm:$0xff] 0.0
      %67 = vst [vmem:[#allocation2 + $0x18] sm:$0xff] 0.0
    $region37: #{tpu_custom_call.1} parent=1 // pred_fallthru
      _
    %v68 = vld [vmem:[#allocation2] sm:$0xff]
    %v69 = vld [vmem:[#allocation2 + $0x8] sm:$0xff]
    %v70 = vld [vmem:[#allocation2 + $0x10] sm:$0xff]
    %v71 = vld [vmem:[#allocation2 + $0x18] sm:$0xff]
    %v72 = vld [vmem:[#allocation3] sm:$0xff]
    %v73 = vld [vmem:[#allocation3 + $0x8] sm:$0xff]
    %v74 = vld [vmem:[#allocation3 + $0x10] sm:$0xff]
    %v75 = vld [vmem:[#allocation3 + $0x18] sm:$0xff]
    %v76 = vld [vmem:[#allocation6] sm:$0xff]
    %v77 = vld [vmem:[#allocation6 + $0x8] sm:$0xff]
    %v78 = vld [vmem:[#allocation6 + $0x10] sm:$0xff]
    %v79 = vld [vmem:[#allocation6 + $0x18] sm:$0xff]
    %v80 = vld [vmem:[#allocation6 + $0x20] sm:$0xff]
    %v81 = vld [vmem:[#allocation6 + $0x28] sm:$0xff]
    %v82 = vld [vmem:[#allocation6 + $0x30] sm:$0xff]
    %v83 = vld [vmem:[#allocation6 + $0x38] sm:$0xff]
    %v84 = vld [vmem:[#allocation6 + $0x40] sm:$0xff]
    %v85 = vld [vmem:[#allocation6 + $0x48] sm:$0xff]
    %v86 = vld [vmem:[#allocation6 + $0x50] sm:$0xff]
    %v87 = vld [vmem:[#allocation6 + $0x58] sm:$0xff]
    %v88 = vld [vmem:[#allocation6 + $0x60] sm:$0xff]
    %v89 = vld [vmem:[#allocation6 + $0x68] sm:$0xff]
    %v90 = vld [vmem:[#allocation6 + $0x70] sm:$0xff]
    %v91 = vld [vmem:[#allocation6 + $0x78] sm:$0xff]
    %v92 = vld [vmem:[#allocation6 + $0x80] sm:$0xff]
    %v93 = vld [vmem:[#allocation6 + $0x88] sm:$0xff]
    %v94 = vld [vmem:[#allocation6 + $0x90] sm:$0xff]
    %v95 = vld [vmem:[#allocation6 + $0x98] sm:$0xff]
    %v96 = vld [vmem:[#allocation6 + $0xa0] sm:$0xff]
    %v97 = vld [vmem:[#allocation6 + $0xa8] sm:$0xff]
    %v98 = vld [vmem:[#allocation6 + $0xb0] sm:$0xff]
    %v99 = vld [vmem:[#allocation6 + $0xb8] sm:$0xff]
    %v100 = vld [vmem:[#allocation6 + $0xc0] sm:$0xff]
    %v101 = vld [vmem:[#allocation6 + $0xc8] sm:$0xff]
    %v102 = vld [vmem:[#allocation6 + $0xd0] sm:$0xff]
    %v103 = vld [vmem:[#allocation6 + $0xd8] sm:$0xff]
    %v104 = vld [vmem:[#allocation6 + $0xe0] sm:$0xff]
    %v105 = vld [vmem:[#allocation6 + $0xe8] sm:$0xff]
    %v106 = vld [vmem:[#allocation6 + $0xf0] sm:$0xff]
    %v107 = vld [vmem:[#allocation6 + $0xf8] sm:$0xff]
    %v108 = vld [vmem:[#allocation6 + $0x100] sm:$0xff]
    %v109 = vld [vmem:[#allocation6 + $0x108] sm:$0xff]
    %v110 = vld [vmem:[#allocation6 + $0x110] sm:$0xff]
    %v111 = vld [vmem:[#allocation6 + $0x118] sm:$0xff]
    %v112 = vld [vmem:[#allocation6 + $0x120] sm:$0xff]
    %v113 = vld [vmem:[#allocation6 + $0x128] sm:$0xff]
    %v114 = vld [vmem:[#allocation6 + $0x130] sm:$0xff]
    %v115 = vld [vmem:[#allocation6 + $0x138] sm:$0xff]
    %v116 = vld [vmem:[#allocation6 + $0x140] sm:$0xff]
    %v117 = vld [vmem:[#allocation6 + $0x148] sm:$0xff]
    %v118 = vld [vmem:[#allocation6 + $0x150] sm:$0xff]
    %v119 = vld [vmem:[#allocation6 + $0x158] sm:$0xff]
    %v120 = vld [vmem:[#allocation6 + $0x160] sm:$0xff]
    %v121 = vld [vmem:[#allocation6 + $0x168] sm:$0xff]
    %v122 = vld [vmem:[#allocation6 + $0x170] sm:$0xff]
    %v123 = vld [vmem:[#allocation6 + $0x178] sm:$0xff]
    %v124 = vld [vmem:[#allocation6 + $0x180] sm:$0xff]
    %v125 = vld [vmem:[#allocation6 + $0x188] sm:$0xff]
    %v126 = vld [vmem:[#allocation6 + $0x190] sm:$0xff]
    %v127 = vld [vmem:[#allocation6 + $0x198] sm:$0xff]
    %v128 = vld [vmem:[#allocation6 + $0x1a0] sm:$0xff]
    %v129 = vld [vmem:[#allocation6 + $0x1a8] sm:$0xff]
    %v130 = vld [vmem:[#allocation6 + $0x1b0] sm:$0xff]
    %v131 = vld [vmem:[#allocation6 + $0x1b8] sm:$0xff]
    %v132 = vld [vmem:[#allocation6 + $0x1c0] sm:$0xff]
    %v133 = vld [vmem:[#allocation6 + $0x1c8] sm:$0xff]
    %v134 = vld [vmem:[#allocation6 + $0x1d0] sm:$0xff]
    %v135 = vld [vmem:[#allocation6 + $0x1d8] sm:$0xff]
    %v136 = vld [vmem:[#allocation6 + $0x1e0] sm:$0xff]
    %v137 = vld [vmem:[#allocation6 + $0x1e8] sm:$0xff]
    %v138 = vld [vmem:[#allocation6 + $0x1f0] sm:$0xff]
    %v139 = vld [vmem:[#allocation6 + $0x1f8] sm:$0xff]
    %v140 = vld [vmem:[#allocation6 + $0x200] sm:$0xff]
    %v141 = vld [vmem:[#allocation6 + $0x208] sm:$0xff]
    %v142 = vld [vmem:[#allocation6 + $0x210] sm:$0xff]
    %v143 = vld [vmem:[#allocation6 + $0x218] sm:$0xff]
    %v144 = vld [vmem:[#allocation6 + $0x220] sm:$0xff]
    %v145 = vld [vmem:[#allocation6 + $0x228] sm:$0xff]
    %v146 = vld [vmem:[#allocation6 + $0x230] sm:$0xff]
    %v147 = vld [vmem:[#allocation6 + $0x238] sm:$0xff]
    %v148 = vld [vmem:[#allocation6 + $0x240] sm:$0xff]
    %v149 = vld [vmem:[#allocation6 + $0x248] sm:$0xff]
    %v150 = vld [vmem:[#allocation6 + $0x250] sm:$0xff]
    %v151 = vld [vmem:[#allocation6 + $0x258] sm:$0xff]
    %v152 = vld [vmem:[#allocation6 + $0x260] sm:$0xff]
    %v153 = vld [vmem:[#allocation6 + $0x268] sm:$0xff]
    %v154 = vld [vmem:[#allocation6 + $0x270] sm:$0xff]
    %v155 = vld [vmem:[#allocation6 + $0x278] sm:$0xff]
    %v156 = vld [vmem:[#allocation6 + $0x280] sm:$0xff]
    %v157 = vld [vmem:[#allocation6 + $0x288] sm:$0xff]
    %v158 = vld [vmem:[#allocation6 + $0x290] sm:$0xff]
    %v159 = vld [vmem:[#allocation6 + $0x298] sm:$0xff]
    %v160 = vld [vmem:[#allocation6 + $0x2a0] sm:$0xff]
    %v161 = vld [vmem:[#allocation6 + $0x2a8] sm:$0xff]
    %v162 = vld [vmem:[#allocation6 + $0x2b0] sm:$0xff]
    %v163 = vld [vmem:[#allocation6 + $0x2b8] sm:$0xff]
    %v164 = vld [vmem:[#allocation6 + $0x2c0] sm:$0xff]
    %v165 = vld [vmem:[#allocation6 + $0x2c8] sm:$0xff]
    %v166 = vld [vmem:[#allocation6 + $0x2d0] sm:$0xff]
    %v167 = vld [vmem:[#allocation6 + $0x2d8] sm:$0xff]
    %v168 = vld [vmem:[#allocation6 + $0x2e0] sm:$0xff]
    %v169 = vld [vmem:[#allocation6 + $0x2e8] sm:$0xff]
    %v170 = vld [vmem:[#allocation6 + $0x2f0] sm:$0xff]
    %v171 = vld [vmem:[#allocation6 + $0x2f8] sm:$0xff]
    %v172 = vld [vmem:[#allocation6 + $0x300] sm:$0xff]
    %v173 = vld [vmem:[#allocation6 + $0x308] sm:$0xff]
    %v174 = vld [vmem:[#allocation6 + $0x310] sm:$0xff]
    %v175 = vld [vmem:[#allocation6 + $0x318] sm:$0xff]
    %v176 = vld [vmem:[#allocation6 + $0x320] sm:$0xff]
    %v177 = vld [vmem:[#allocation6 + $0x328] sm:$0xff]
    %v178 = vld [vmem:[#allocation6 + $0x330] sm:$0xff]
    %v179 = vld [vmem:[#allocation6 + $0x338] sm:$0xff]
    %v180 = vld [vmem:[#allocation6 + $0x340] sm:$0xff]
    %v181 = vld [vmem:[#allocation6 + $0x348] sm:$0xff]
    %v182 = vld [vmem:[#allocation6 + $0x350] sm:$0xff]
    %v183 = vld [vmem:[#allocation6 + $0x358] sm:$0xff]
    %v184 = vld [vmem:[#allocation6 + $0x360] sm:$0xff]
    %v185 = vld [vmem:[#allocation6 + $0x368] sm:$0xff]
    %v186 = vld [vmem:[#allocation6 + $0x370] sm:$0xff]
    %v187 = vld [vmem:[#allocation6 + $0x378] sm:$0xff]
    %v188 = vld [vmem:[#allocation6 + $0x380] sm:$0xff]
    %v189 = vld [vmem:[#allocation6 + $0x388] sm:$0xff]
    %v190 = vld [vmem:[#allocation6 + $0x390] sm:$0xff]
    %v191 = vld [vmem:[#allocation6 + $0x398] sm:$0xff]
    %v192 = vld [vmem:[#allocation6 + $0x3a0] sm:$0xff]
    %v193 = vld [vmem:[#allocation6 + $0x3a8] sm:$0xff]
    %v194 = vld [vmem:[#allocation6 + $0x3b0] sm:$0xff]
    %v195 = vld [vmem:[#allocation6 + $0x3b8] sm:$0xff]
    %v196 = vld [vmem:[#allocation6 + $0x3c0] sm:$0xff]
    %v197 = vld [vmem:[#allocation6 + $0x3c8] sm:$0xff]
    %v198 = vld [vmem:[#allocation6 + $0x3d0] sm:$0xff]
    %v199 = vld [vmem:[#allocation6 + $0x3d8] sm:$0xff]
    %v200 = vld [vmem:[#allocation6 + $0x3e0] sm:$0xff]
    %v201 = vld [vmem:[#allocation6 + $0x3e8] sm:$0xff]
    %v202 = vld [vmem:[#allocation6 + $0x3f0] sm:$0xff]
    %v203 = vld [vmem:[#allocation6 + $0x3f8] sm:$0xff]
    %v204 = vld [vmem:[#allocation6 + $0x400] sm:$0xff]
    %v205 = vld [vmem:[#allocation6 + $0x408] sm:$0xff]
    %v206 = vld [vmem:[#allocation6 + $0x410] sm:$0xff]
    %v207 = vld [vmem:[#allocation6 + $0x418] sm:$0xff]
    %v208 = vld [vmem:[#allocation6 + $0x420] sm:$0xff]
    %v209 = vld [vmem:[#allocation6 + $0x428] sm:$0xff]
    %v210 = vld [vmem:[#allocation6 + $0x430] sm:$0xff]
    %v211 = vld [vmem:[#allocation6 + $0x438] sm:$0xff]
    %v212 = vld [vmem:[#allocation6 + $0x440] sm:$0xff]
    %v213 = vld [vmem:[#allocation6 + $0x448] sm:$0xff]
    %v214 = vld [vmem:[#allocation6 + $0x450] sm:$0xff]
    %v215 = vld [vmem:[#allocation6 + $0x458] sm:$0xff]
    %v216 = vld [vmem:[#allocation6 + $0x460] sm:$0xff]
    %v217 = vld [vmem:[#allocation6 + $0x468] sm:$0xff]
    %v218 = vld [vmem:[#allocation6 + $0x470] sm:$0xff]
    %v219 = vld [vmem:[#allocation6 + $0x478] sm:$0xff]
    %v220 = vld [vmem:[#allocation6 + $0x480] sm:$0xff]
    %v221 = vld [vmem:[#allocation6 + $0x488] sm:$0xff]
    %v222 = vld [vmem:[#allocation6 + $0x490] sm:$0xff]
    %v223 = vld [vmem:[#allocation6 + $0x498] sm:$0xff]
    %v224 = vld [vmem:[#allocation6 + $0x4a0] sm:$0xff]
    %v225 = vld [vmem:[#allocation6 + $0x4a8] sm:$0xff]
    %v226 = vld [vmem:[#allocation6 + $0x4b0] sm:$0xff]
    %v227 = vld [vmem:[#allocation6 + $0x4b8] sm:$0xff]
    %v228 = vld [vmem:[#allocation6 + $0x4c0] sm:$0xff]
    %v229 = vld [vmem:[#allocation6 + $0x4c8] sm:$0xff]
    %v230 = vld [vmem:[#allocation6 + $0x4d0] sm:$0xff]
    %v231 = vld [vmem:[#allocation6 + $0x4d8] sm:$0xff]
    %v232 = vld [vmem:[#allocation6 + $0x4e0] sm:$0xff]
    %v233 = vld [vmem:[#allocation6 + $0x4e8] sm:$0xff]
    %v234 = vld [vmem:[#allocation6 + $0x4f0] sm:$0xff]
    %v235 = vld [vmem:[#allocation6 + $0x4f8] sm:$0xff]
    %v236 = vld [vmem:[#allocation6 + $0x500] sm:$0xff]
    %v237 = vld [vmem:[#allocation6 + $0x508] sm:$0xff]
    %v238 = vld [vmem:[#allocation6 + $0x510] sm:$0xff]
    %v239 = vld [vmem:[#allocation6 + $0x518] sm:$0xff]
    %v240 = vld [vmem:[#allocation6 + $0x520] sm:$0xff]
    %v241 = vld [vmem:[#allocation6 + $0x528] sm:$0xff]
    %v242 = vld [vmem:[#allocation6 + $0x530] sm:$0xff]
    %v243 = vld [vmem:[#allocation6 + $0x538] sm:$0xff]
    %v244 = vld [vmem:[#allocation6 + $0x540] sm:$0xff]
    %v245 = vld [vmem:[#allocation6 + $0x548] sm:$0xff]
    %v246 = vld [vmem:[#allocation6 + $0x550] sm:$0xff]
    %v247 = vld [vmem:[#allocation6 + $0x558] sm:$0xff]
    %v248 = vld [vmem:[#allocation6 + $0x560] sm:$0xff]
    %v249 = vld [vmem:[#allocation6 + $0x568] sm:$0xff]
    %v250 = vld [vmem:[#allocation6 + $0x570] sm:$0xff]
    %v251 = vld [vmem:[#allocation6 + $0x578] sm:$0xff]
    %v252 = vld [vmem:[#allocation6 + $0x580] sm:$0xff]
    %v253 = vld [vmem:[#allocation6 + $0x588] sm:$0xff]
    %v254 = vld [vmem:[#allocation6 + $0x590] sm:$0xff]
    %v255 = vld [vmem:[#allocation6 + $0x598] sm:$0xff]
    %v256 = vld [vmem:[#allocation6 + $0x5a0] sm:$0xff]
    %v257 = vld [vmem:[#allocation6 + $0x5a8] sm:$0xff]
    %v258 = vld [vmem:[#allocation6 + $0x5b0] sm:$0xff]
    %v259 = vld [vmem:[#allocation6 + $0x5b8] sm:$0xff]
    %v260 = vld [vmem:[#allocation6 + $0x5c0] sm:$0xff]
    %v261 = vld [vmem:[#allocation6 + $0x5c8] sm:$0xff]
    %v262 = vld [vmem:[#allocation6 + $0x5d0] sm:$0xff]
    %v263 = vld [vmem:[#allocation6 + $0x5d8] sm:$0xff]
    %v264 = vld [vmem:[#allocation6 + $0x5e0] sm:$0xff]
    %v265 = vld [vmem:[#allocation6 + $0x5e8] sm:$0xff]
    %v266 = vld [vmem:[#allocation6 + $0x5f0] sm:$0xff]
    %v267 = vld [vmem:[#allocation6 + $0x5f8] sm:$0xff]
    %v268 = vld [vmem:[#allocation6 + $0x600] sm:$0xff]
    %v269 = vld [vmem:[#allocation6 + $0x608] sm:$0xff]
    %v270 = vld [vmem:[#allocation6 + $0x610] sm:$0xff]
    %v271 = vld [vmem:[#allocation6 + $0x618] sm:$0xff]
    %v272 = vld [vmem:[#allocation6 + $0x620] sm:$0xff]
    %v273 = vld [vmem:[#allocation6 + $0x628] sm:$0xff]
    %v274 = vld [vmem:[#allocation6 + $0x630] sm:$0xff]
    %v275 = vld [vmem:[#allocation6 + $0x638] sm:$0xff]
    %v276 = vld [vmem:[#allocation6 + $0x640] sm:$0xff]
    %v277 = vld [vmem:[#allocation6 + $0x648] sm:$0xff]
    %v278 = vld [vmem:[#allocation6 + $0x650] sm:$0xff]
    %v279 = vld [vmem:[#allocation6 + $0x658] sm:$0xff]
    %v280 = vld [vmem:[#allocation6 + $0x660] sm:$0xff]
    %v281 = vld [vmem:[#allocation6 + $0x668] sm:$0xff]
    %v282 = vld [vmem:[#allocation6 + $0x670] sm:$0xff]
    %v283 = vld [vmem:[#allocation6 + $0x678] sm:$0xff]
    %v284 = vld [vmem:[#allocation6 + $0x680] sm:$0xff]
    %v285 = vld [vmem:[#allocation6 + $0x688] sm:$0xff]
    %v286 = vld [vmem:[#allocation6 + $0x690] sm:$0xff]
    %v287 = vld [vmem:[#allocation6 + $0x698] sm:$0xff]
    %v288 = vld [vmem:[#allocation6 + $0x6a0] sm:$0xff]
    %v289 = vld [vmem:[#allocation6 + $0x6a8] sm:$0xff]
    %v290 = vld [vmem:[#allocation6 + $0x6b0] sm:$0xff]
    %v291 = vld [vmem:[#allocation6 + $0x6b8] sm:$0xff]
    %v292 = vld [vmem:[#allocation6 + $0x6c0] sm:$0xff]
    %v293 = vld [vmem:[#allocation6 + $0x6c8] sm:$0xff]
    %v294 = vld [vmem:[#allocation6 + $0x6d0] sm:$0xff]
    %v295 = vld [vmem:[#allocation6 + $0x6d8] sm:$0xff]
    %v296 = vld [vmem:[#allocation6 + $0x6e0] sm:$0xff]
    %v297 = vld [vmem:[#allocation6 + $0x6e8] sm:$0xff]
    %v298 = vld [vmem:[#allocation6 + $0x6f0] sm:$0xff]
    %v299 = vld [vmem:[#allocation6 + $0x6f8] sm:$0xff]
    %v300 = vld [vmem:[#allocation6 + $0x700] sm:$0xff]
    %v301 = vld [vmem:[#allocation6 + $0x708] sm:$0xff]
    %v302 = vld [vmem:[#allocation6 + $0x710] sm:$0xff]
    %v303 = vld [vmem:[#allocation6 + $0x718] sm:$0xff]
    %v304 = vld [vmem:[#allocation6 + $0x720] sm:$0xff]
    %v305 = vld [vmem:[#allocation6 + $0x728] sm:$0xff]
    %v306 = vld [vmem:[#allocation6 + $0x730] sm:$0xff]
    %v307 = vld [vmem:[#allocation6 + $0x738] sm:$0xff]
    %v308 = vld [vmem:[#allocation6 + $0x740] sm:$0xff]
    %v309 = vld [vmem:[#allocation6 + $0x748] sm:$0xff]
    %v310 = vld [vmem:[#allocation6 + $0x750] sm:$0xff]
    %v311 = vld [vmem:[#allocation6 + $0x758] sm:$0xff]
    %v312 = vld [vmem:[#allocation6 + $0x760] sm:$0xff]
    %v313 = vld [vmem:[#allocation6 + $0x768] sm:$0xff]
    %v314 = vld [vmem:[#allocation6 + $0x770] sm:$0xff]
    %v315 = vld [vmem:[#allocation6 + $0x778] sm:$0xff]
    %v316 = vld [vmem:[#allocation6 + $0x780] sm:$0xff]
    %v317 = vld [vmem:[#allocation6 + $0x788] sm:$0xff]
    %v318 = vld [vmem:[#allocation6 + $0x790] sm:$0xff]
    %v319 = vld [vmem:[#allocation6 + $0x798] sm:$0xff]
    %v320 = vld [vmem:[#allocation6 + $0x7a0] sm:$0xff]
    %v321 = vld [vmem:[#allocation6 + $0x7a8] sm:$0xff]
    %v322 = vld [vmem:[#allocation6 + $0x7b0] sm:$0xff]
    %v323 = vld [vmem:[#allocation6 + $0x7b8] sm:$0xff]
    %v324 = vld [vmem:[#allocation6 + $0x7c0] sm:$0xff]
    %v325 = vld [vmem:[#allocation6 + $0x7c8] sm:$0xff]
    %v326 = vld [vmem:[#allocation6 + $0x7d0] sm:$0xff]
    %v327 = vld [vmem:[#allocation6 + $0x7d8] sm:$0xff]
    %v328 = vld [vmem:[#allocation6 + $0x7e0] sm:$0xff]
    %v329 = vld [vmem:[#allocation6 + $0x7e8] sm:$0xff]
    %v330 = vld [vmem:[#allocation6 + $0x7f0] sm:$0xff]
    %v331 = vld [vmem:[#allocation6 + $0x7f8] sm:$0xff]
    %v336 = vunpack.c.l.b16 %v72
    %v337 = vunpack.c.h.b16 %v72
    %v338 = vunpack.c.l.b16 %v73
    %v339 = vunpack.c.h.b16 %v73
    %v340 = vunpack.c.l.b16 %v74
    %v341 = vunpack.c.h.b16 %v74
    %v342 = vunpack.c.l.b16 %v75
    %v343 = vunpack.c.h.b16 %v75
    %v344 = vpack.c.b16 %v336, %v336
    %v345 = vpack.c.b16 %v337, %v337
    %v346 = vpack.c.b16 %v338, %v338
    %v347 = vpack.c.b16 %v339, %v339
    %v348 = vpack.c.b16 %v340, %v340
    %v349 = vpack.c.b16 %v341, %v341
    %v350 = vpack.c.b16 %v342, %v342
    %v351 = vpack.c.b16 %v343, %v343
    %v616 = vunpack.c.l.b16 %v76
    %v617 = vunpack.c.h.b16 %v76
    %v618 = vunpack.c.l.b16 %v77
    %v619 = vunpack.c.h.b16 %v77
    %v620 = vunpack.c.l.b16 %v78
    %v621 = vunpack.c.h.b16 %v78
    %v622 = vunpack.c.l.b16 %v79
    %v623 = vunpack.c.h.b16 %v79
    %v624 = vunpack.c.l.b16 %v80
    %v625 = vunpack.c.h.b16 %v80
    %v626 = vunpack.c.l.b16 %v81
    %v627 = vunpack.c.h.b16 %v81
    %v628 = vunpack.c.l.b16 %v82
    %v629 = vunpack.c.h.b16 %v82
    %v630 = vunpack.c.l.b16 %v83
    %v631 = vunpack.c.h.b16 %v83
    %v632 = vunpack.c.l.b16 %v84
    %v633 = vunpack.c.h.b16 %v84
    %v634 = vunpack.c.l.b16 %v85
    %v635 = vunpack.c.h.b16 %v85
    %v636 = vunpack.c.l.b16 %v86
    %v637 = vunpack.c.h.b16 %v86
    %v638 = vunpack.c.l.b16 %v87
    %v639 = vunpack.c.h.b16 %v87
    %v640 = vunpack.c.l.b16 %v88
    %v641 = vunpack.c.h.b16 %v88
    %v642 = vunpack.c.l.b16 %v89
    %v643 = vunpack.c.h.b16 %v89
    %v644 = vunpack.c.l.b16 %v90
    %v645 = vunpack.c.h.b16 %v90
    %v646 = vunpack.c.l.b16 %v91
    %v647 = vunpack.c.h.b16 %v91
    %v648 = vunpack.c.l.b16 %v92
    %v649 = vunpack.c.h.b16 %v92
    %v650 = vunpack.c.l.b16 %v93
    %v651 = vunpack.c.h.b16 %v93
    %v652 = vunpack.c.l.b16 %v94
    %v653 = vunpack.c.h.b16 %v94
    %v654 = vunpack.c.l.b16 %v95
    %v655 = vunpack.c.h.b16 %v95
    %v656 = vunpack.c.l.b16 %v96
    %v657 = vunpack.c.h.b16 %v96
    %v658 = vunpack.c.l.b16 %v97
    %v659 = vunpack.c.h.b16 %v97
    %v660 = vunpack.c.l.b16 %v98
    %v661 = vunpack.c.h.b16 %v98
    %v662 = vunpack.c.l.b16 %v99
    %v663 = vunpack.c.h.b16 %v99
    %v664 = vunpack.c.l.b16 %v100
    %v665 = vunpack.c.h.b16 %v100
    %v666 = vunpack.c.l.b16 %v101
    %v667 = vunpack.c.h.b16 %v101
    %v668 = vunpack.c.l.b16 %v102
    %v669 = vunpack.c.h.b16 %v102
    %v670 = vunpack.c.l.b16 %v103
    %v671 = vunpack.c.h.b16 %v103
    %v672 = vunpack.c.l.b16 %v104
    %v673 = vunpack.c.h.b16 %v104
    %v674 = vunpack.c.l.b16 %v105
    %v675 = vunpack.c.h.b16 %v105
    %v676 = vunpack.c.l.b16 %v106
    %v677 = vunpack.c.h.b16 %v106
    %v678 = vunpack.c.l.b16 %v107
    %v679 = vunpack.c.h.b16 %v107
    %v680 = vunpack.c.l.b16 %v108
    %v681 = vunpack.c.h.b16 %v108
    %v682 = vunpack.c.l.b16 %v109
    %v683 = vunpack.c.h.b16 %v109
    %v684 = vunpack.c.l.b16 %v110
    %v685 = vunpack.c.h.b16 %v110
    %v686 = vunpack.c.l.b16 %v111
    %v687 = vunpack.c.h.b16 %v111
    %v688 = vunpack.c.l.b16 %v112
    %v689 = vunpack.c.h.b16 %v112
    %v690 = vunpack.c.l.b16 %v113
    %v691 = vunpack.c.h.b16 %v113
    %v692 = vunpack.c.l.b16 %v114
    %v693 = vunpack.c.h.b16 %v114
    %v694 = vunpack.c.l.b16 %v115
    %v695 = vunpack.c.h.b16 %v115
    %v696 = vunpack.c.l.b16 %v116
    %v697 = vunpack.c.h.b16 %v116
    %v698 = vunpack.c.l.b16 %v117
    %v699 = vunpack.c.h.b16 %v117
    %v700 = vunpack.c.l.b16 %v118
    %v701 = vunpack.c.h.b16 %v118
    %v702 = vunpack.c.l.b16 %v119
    %v703 = vunpack.c.h.b16 %v119
    %v704 = vunpack.c.l.b16 %v120
    %v705 = vunpack.c.h.b16 %v120
    %v706 = vunpack.c.l.b16 %v121
    %v707 = vunpack.c.h.b16 %v121
    %v708 = vunpack.c.l.b16 %v122
    %v709 = vunpack.c.h.b16 %v122
    %v710 = vunpack.c.l.b16 %v123
    %v711 = vunpack.c.h.b16 %v123
    %v712 = vunpack.c.l.b16 %v124
    %v713 = vunpack.c.h.b16 %v124
    %v714 = vunpack.c.l.b16 %v125
    %v715 = vunpack.c.h.b16 %v125
    %v716 = vunpack.c.l.b16 %v126
    %v717 = vunpack.c.h.b16 %v126
    %v718 = vunpack.c.l.b16 %v127
    %v719 = vunpack.c.h.b16 %v127
    %v720 = vunpack.c.l.b16 %v128
    %v721 = vunpack.c.h.b16 %v128
    %v722 = vunpack.c.l.b16 %v129
    %v723 = vunpack.c.h.b16 %v129
    %v724 = vunpack.c.l.b16 %v130
    %v725 = vunpack.c.h.b16 %v130
    %v726 = vunpack.c.l.b16 %v131
    %v727 = vunpack.c.h.b16 %v131
    %v728 = vunpack.c.l.b16 %v132
    %v729 = vunpack.c.h.b16 %v132
    %v730 = vunpack.c.l.b16 %v133
    %v731 = vunpack.c.h.b16 %v133
    %v732 = vunpack.c.l.b16 %v134
    %v733 = vunpack.c.h.b16 %v134
    %v734 = vunpack.c.l.b16 %v135
    %v735 = vunpack.c.h.b16 %v135
    %v736 = vunpack.c.l.b16 %v136
    %v737 = vunpack.c.h.b16 %v136
    %v738 = vunpack.c.l.b16 %v137
    %v739 = vunpack.c.h.b16 %v137
    %v740 = vunpack.c.l.b16 %v138
    %v741 = vunpack.c.h.b16 %v138
    %v742 = vunpack.c.l.b16 %v139
    %v743 = vunpack.c.h.b16 %v139
    %v744 = vunpack.c.l.b16 %v140
    %v745 = vunpack.c.h.b16 %v140
    %v746 = vunpack.c.l.b16 %v141
    %v747 = vunpack.c.h.b16 %v141
    %v748 = vunpack.c.l.b16 %v142
    %v749 = vunpack.c.h.b16 %v142
    %v750 = vunpack.c.l.b16 %v143
    %v751 = vunpack.c.h.b16 %v143
    %v752 = vunpack.c.l.b16 %v144
    %v753 = vunpack.c.h.b16 %v144
    %v754 = vunpack.c.l.b16 %v145
    %v755 = vunpack.c.h.b16 %v145
    %v756 = vunpack.c.l.b16 %v146
    %v757 = vunpack.c.h.b16 %v146
    %v758 = vunpack.c.l.b16 %v147
    %v759 = vunpack.c.h.b16 %v147
    %v760 = vunpack.c.l.b16 %v148
    %v761 = vunpack.c.h.b16 %v148
    %v762 = vunpack.c.l.b16 %v149
    %v763 = vunpack.c.h.b16 %v149
    %v764 = vunpack.c.l.b16 %v150
    %v765 = vunpack.c.h.b16 %v150
    %v766 = vunpack.c.l.b16 %v151
    %v767 = vunpack.c.h.b16 %v151
    %v768 = vunpack.c.l.b16 %v152
    %v769 = vunpack.c.h.b16 %v152
    %v770 = vunpack.c.l.b16 %v153
    %v771 = vunpack.c.h.b16 %v153
    %v772 = vunpack.c.l.b16 %v154
    %v773 = vunpack.c.h.b16 %v154
    %v774 = vunpack.c.l.b16 %v155
    %v775 = vunpack.c.h.b16 %v155
    %v776 = vunpack.c.l.b16 %v156
    %v777 = vunpack.c.h.b16 %v156
    %v778 = vunpack.c.l.b16 %v157
    %v779 = vunpack.c.h.b16 %v157
    %v780 = vunpack.c.l.b16 %v158
    %v781 = vunpack.c.h.b16 %v158
    %v782 = vunpack.c.l.b16 %v159
    %v783 = vunpack.c.h.b16 %v159
    %v784 = vunpack.c.l.b16 %v160
    %v785 = vunpack.c.h.b16 %v160
    %v786 = vunpack.c.l.b16 %v161
    %v787 = vunpack.c.h.b16 %v161
    %v788 = vunpack.c.l.b16 %v162
    %v789 = vunpack.c.h.b16 %v162
    %v790 = vunpack.c.l.b16 %v163
    %v791 = vunpack.c.h.b16 %v163
    %v792 = vunpack.c.l.b16 %v164
    %v793 = vunpack.c.h.b16 %v164
    %v794 = vunpack.c.l.b16 %v165
    %v795 = vunpack.c.h.b16 %v165
    %v796 = vunpack.c.l.b16 %v166
    %v797 = vunpack.c.h.b16 %v166
    %v798 = vunpack.c.l.b16 %v167
    %v799 = vunpack.c.h.b16 %v167
    %v800 = vunpack.c.l.b16 %v168
    %v801 = vunpack.c.h.b16 %v168
    %v802 = vunpack.c.l.b16 %v169
    %v803 = vunpack.c.h.b16 %v169
    %v804 = vunpack.c.l.b16 %v170
    %v805 = vunpack.c.h.b16 %v170
    %v806 = vunpack.c.l.b16 %v171
    %v807 = vunpack.c.h.b16 %v171
    %v808 = vunpack.c.l.b16 %v172
    %v809 = vunpack.c.h.b16 %v172
    %v810 = vunpack.c.l.b16 %v173
    %v811 = vunpack.c.h.b16 %v173
    %v812 = vunpack.c.l.b16 %v174
    %v813 = vunpack.c.h.b16 %v174
    %v814 = vunpack.c.l.b16 %v175
    %v815 = vunpack.c.h.b16 %v175
    %v816 = vunpack.c.l.b16 %v176
    %v817 = vunpack.c.h.b16 %v176
    %v818 = vunpack.c.l.b16 %v177
    %v819 = vunpack.c.h.b16 %v177
    %v820 = vunpack.c.l.b16 %v178
    %v821 = vunpack.c.h.b16 %v178
    %v822 = vunpack.c.l.b16 %v179
    %v823 = vunpack.c.h.b16 %v179
    %v824 = vunpack.c.l.b16 %v180
    %v825 = vunpack.c.h.b16 %v180
    %v826 = vunpack.c.l.b16 %v181
    %v827 = vunpack.c.h.b16 %v181
    %v828 = vunpack.c.l.b16 %v182
    %v829 = vunpack.c.h.b16 %v182
    %v830 = vunpack.c.l.b16 %v183
    %v831 = vunpack.c.h.b16 %v183
    %v832 = vunpack.c.l.b16 %v184
    %v833 = vunpack.c.h.b16 %v184
    %v834 = vunpack.c.l.b16 %v185
    %v835 = vunpack.c.h.b16 %v185
    %v836 = vunpack.c.l.b16 %v186
    %v837 = vunpack.c.h.b16 %v186
    %v838 = vunpack.c.l.b16 %v187
    %v839 = vunpack.c.h.b16 %v187
    %v840 = vunpack.c.l.b16 %v188
    %v841 = vunpack.c.h.b16 %v188
    %v842 = vunpack.c.l.b16 %v189
    %v843 = vunpack.c.h.b16 %v189
    %v844 = vunpack.c.l.b16 %v190
    %v845 = vunpack.c.h.b16 %v190
    %v846 = vunpack.c.l.b16 %v191
    %v847 = vunpack.c.h.b16 %v191
    %v848 = vunpack.c.l.b16 %v192
    %v849 = vunpack.c.h.b16 %v192
    %v850 = vunpack.c.l.b16 %v193
    %v851 = vunpack.c.h.b16 %v193
    %v852 = vunpack.c.l.b16 %v194
    %v853 = vunpack.c.h.b16 %v194
    %v854 = vunpack.c.l.b16 %v195
    %v855 = vunpack.c.h.b16 %v195
    %v856 = vunpack.c.l.b16 %v196
    %v857 = vunpack.c.h.b16 %v196
    %v858 = vunpack.c.l.b16 %v197
    %v859 = vunpack.c.h.b16 %v197
    %v860 = vunpack.c.l.b16 %v198
    %v861 = vunpack.c.h.b16 %v198
    %v862 = vunpack.c.l.b16 %v199
    %v863 = vunpack.c.h.b16 %v199
    %v864 = vunpack.c.l.b16 %v200
    %v865 = vunpack.c.h.b16 %v200
    %v866 = vunpack.c.l.b16 %v201
    %v867 = vunpack.c.h.b16 %v201
    %v868 = vunpack.c.l.b16 %v202
    %v869 = vunpack.c.h.b16 %v202
    %v870 = vunpack.c.l.b16 %v203
    %v871 = vunpack.c.h.b16 %v203
    %v872 = vunpack.c.l.b16 %v204
    %v873 = vunpack.c.h.b16 %v204
    %v874 = vunpack.c.l.b16 %v205
    %v875 = vunpack.c.h.b16 %v205
    %v876 = vunpack.c.l.b16 %v206
    %v877 = vunpack.c.h.b16 %v206
    %v878 = vunpack.c.l.b16 %v207
    %v879 = vunpack.c.h.b16 %v207
    %v880 = vunpack.c.l.b16 %v208
    %v881 = vunpack.c.h.b16 %v208
    %v882 = vunpack.c.l.b16 %v209
    %v883 = vunpack.c.h.b16 %v209
    %v884 = vunpack.c.l.b16 %v210
    %v885 = vunpack.c.h.b16 %v210
    %v886 = vunpack.c.l.b16 %v211
    %v887 = vunpack.c.h.b16 %v211
    %v888 = vunpack.c.l.b16 %v212
    %v889 = vunpack.c.h.b16 %v212
    %v890 = vunpack.c.l.b16 %v213
    %v891 = vunpack.c.h.b16 %v213
    %v892 = vunpack.c.l.b16 %v214
    %v893 = vunpack.c.h.b16 %v214
    %v894 = vunpack.c.l.b16 %v215
    %v895 = vunpack.c.h.b16 %v215
    %v896 = vunpack.c.l.b16 %v216
    %v897 = vunpack.c.h.b16 %v216
    %v898 = vunpack.c.l.b16 %v217
    %v899 = vunpack.c.h.b16 %v217
    %v900 = vunpack.c.l.b16 %v218
    %v901 = vunpack.c.h.b16 %v218
    %v902 = vunpack.c.l.b16 %v219
    %v903 = vunpack.c.h.b16 %v219
    %v904 = vunpack.c.l.b16 %v220
    %v905 = vunpack.c.h.b16 %v220
    %v906 = vunpack.c.l.b16 %v221
    %v907 = vunpack.c.h.b16 %v221
    %v908 = vunpack.c.l.b16 %v222
    %v909 = vunpack.c.h.b16 %v222
    %v910 = vunpack.c.l.b16 %v223
    %v911 = vunpack.c.h.b16 %v223
    %v912 = vunpack.c.l.b16 %v224
    %v913 = vunpack.c.h.b16 %v224
    %v914 = vunpack.c.l.b16 %v225
    %v915 = vunpack.c.h.b16 %v225
    %v916 = vunpack.c.l.b16 %v226
    %v917 = vunpack.c.h.b16 %v226
    %v918 = vunpack.c.l.b16 %v227
    %v919 = vunpack.c.h.b16 %v227
    %v920 = vunpack.c.l.b16 %v228
    %v921 = vunpack.c.h.b16 %v228
    %v922 = vunpack.c.l.b16 %v229
    %v923 = vunpack.c.h.b16 %v229
    %v924 = vunpack.c.l.b16 %v230
    %v925 = vunpack.c.h.b16 %v230
    %v926 = vunpack.c.l.b16 %v231
    %v927 = vunpack.c.h.b16 %v231
    %v928 = vunpack.c.l.b16 %v232
    %v929 = vunpack.c.h.b16 %v232
    %v930 = vunpack.c.l.b16 %v233
    %v931 = vunpack.c.h.b16 %v233
    %v932 = vunpack.c.l.b16 %v234
    %v933 = vunpack.c.h.b16 %v234
    %v934 = vunpack.c.l.b16 %v235
    %v935 = vunpack.c.h.b16 %v235
    %v936 = vunpack.c.l.b16 %v236
    %v937 = vunpack.c.h.b16 %v236
    %v938 = vunpack.c.l.b16 %v237
    %v939 = vunpack.c.h.b16 %v237
    %v940 = vunpack.c.l.b16 %v238
    %v941 = vunpack.c.h.b16 %v238
    %v942 = vunpack.c.l.b16 %v239
    %v943 = vunpack.c.h.b16 %v239
    %v944 = vunpack.c.l.b16 %v240
    %v945 = vunpack.c.h.b16 %v240
    %v946 = vunpack.c.l.b16 %v241
    %v947 = vunpack.c.h.b16 %v241
    %v948 = vunpack.c.l.b16 %v242
    %v949 = vunpack.c.h.b16 %v242
    %v950 = vunpack.c.l.b16 %v243
    %v951 = vunpack.c.h.b16 %v243
    %v952 = vunpack.c.l.b16 %v244
    %v953 = vunpack.c.h.b16 %v244
    %v954 = vunpack.c.l.b16 %v245
    %v955 = vunpack.c.h.b16 %v245
    %v956 = vunpack.c.l.b16 %v246
    %v957 = vunpack.c.h.b16 %v246
    %v958 = vunpack.c.l.b16 %v247
    %v959 = vunpack.c.h.b16 %v247
    %v960 = vunpack.c.l.b16 %v248
    %v961 = vunpack.c.h.b16 %v248
    %v962 = vunpack.c.l.b16 %v249
    %v963 = vunpack.c.h.b16 %v249
    %v964 = vunpack.c.l.b16 %v250
    %v965 = vunpack.c.h.b16 %v250
    %v966 = vunpack.c.l.b16 %v251
    %v967 = vunpack.c.h.b16 %v251
    %v968 = vunpack.c.l.b16 %v252
    %v969 = vunpack.c.h.b16 %v252
    %v970 = vunpack.c.l.b16 %v253
    %v971 = vunpack.c.h.b16 %v253
    %v972 = vunpack.c.l.b16 %v254
    %v973 = vunpack.c.h.b16 %v254
    %v974 = vunpack.c.l.b16 %v255
    %v975 = vunpack.c.h.b16 %v255
    %v976 = vunpack.c.l.b16 %v256
    %v977 = vunpack.c.h.b16 %v256
    %v978 = vunpack.c.l.b16 %v257
    %v979 = vunpack.c.h.b16 %v257
    %v980 = vunpack.c.l.b16 %v258
    %v981 = vunpack.c.h.b16 %v258
    %v982 = vunpack.c.l.b16 %v259
    %v983 = vunpack.c.h.b16 %v259
    %v984 = vunpack.c.l.b16 %v260
    %v985 = vunpack.c.h.b16 %v260
    %v986 = vunpack.c.l.b16 %v261
    %v987 = vunpack.c.h.b16 %v261
    %v988 = vunpack.c.l.b16 %v262
    %v989 = vunpack.c.h.b16 %v262
    %v990 = vunpack.c.l.b16 %v263
    %v991 = vunpack.c.h.b16 %v263
    %v992 = vunpack.c.l.b16 %v264
    %v993 = vunpack.c.h.b16 %v264
    %v994 = vunpack.c.l.b16 %v265
    %v995 = vunpack.c.h.b16 %v265
    %v996 = vunpack.c.l.b16 %v266
    %v997 = vunpack.c.h.b16 %v266
    %v998 = vunpack.c.l.b16 %v267
    %v999 = vunpack.c.h.b16 %v267
    %v1000 = vunpack.c.l.b16 %v268
    %v1001 = vunpack.c.h.b16 %v268
    %v1002 = vunpack.c.l.b16 %v269
    %v1003 = vunpack.c.h.b16 %v269
    %v1004 = vunpack.c.l.b16 %v270
    %v1005 = vunpack.c.h.b16 %v270
    %v1006 = vunpack.c.l.b16 %v271
    %v1007 = vunpack.c.h.b16 %v271
    %v1008 = vunpack.c.l.b16 %v272
    %v1009 = vunpack.c.h.b16 %v272
    %v1010 = vunpack.c.l.b16 %v273
    %v1011 = vunpack.c.h.b16 %v273
    %v1012 = vunpack.c.l.b16 %v274
    %v1013 = vunpack.c.h.b16 %v274
    %v1014 = vunpack.c.l.b16 %v275
    %v1015 = vunpack.c.h.b16 %v275
    %v1016 = vunpack.c.l.b16 %v276
    %v1017 = vunpack.c.h.b16 %v276
    %v1018 = vunpack.c.l.b16 %v277
    %v1019 = vunpack.c.h.b16 %v277
    %v1020 = vunpack.c.l.b16 %v278
    %v1021 = vunpack.c.h.b16 %v278
    %v1022 = vunpack.c.l.b16 %v279
    %v1023 = vunpack.c.h.b16 %v279
    %v1024 = vunpack.c.l.b16 %v280
    %v1025 = vunpack.c.h.b16 %v280
    %v1026 = vunpack.c.l.b16 %v281
    %v1027 = vunpack.c.h.b16 %v281
    %v1028 = vunpack.c.l.b16 %v282
    %v1029 = vunpack.c.h.b16 %v282
    %v1030 = vunpack.c.l.b16 %v283
    %v1031 = vunpack.c.h.b16 %v283
    %v1032 = vunpack.c.l.b16 %v284
    %v1033 = vunpack.c.h.b16 %v284
    %v1034 = vunpack.c.l.b16 %v285
    %v1035 = vunpack.c.h.b16 %v285
    %v1036 = vunpack.c.l.b16 %v286
    %v1037 = vunpack.c.h.b16 %v286
    %v1038 = vunpack.c.l.b16 %v287
    %v1039 = vunpack.c.h.b16 %v287
    %v1040 = vunpack.c.l.b16 %v288
    %v1041 = vunpack.c.h.b16 %v288
    %v1042 = vunpack.c.l.b16 %v289
    %v1043 = vunpack.c.h.b16 %v289
    %v1044 = vunpack.c.l.b16 %v290
    %v1045 = vunpack.c.h.b16 %v290
    %v1046 = vunpack.c.l.b16 %v291
    %v1047 = vunpack.c.h.b16 %v291
    %v1048 = vunpack.c.l.b16 %v292
    %v1049 = vunpack.c.h.b16 %v292
    %v1050 = vunpack.c.l.b16 %v293
    %v1051 = vunpack.c.h.b16 %v293
    %v1052 = vunpack.c.l.b16 %v294
    %v1053 = vunpack.c.h.b16 %v294
    %v1054 = vunpack.c.l.b16 %v295
    %v1055 = vunpack.c.h.b16 %v295
    %v1056 = vunpack.c.l.b16 %v296
    %v1057 = vunpack.c.h.b16 %v296
    %v1058 = vunpack.c.l.b16 %v297
    %v1059 = vunpack.c.h.b16 %v297
    %v1060 = vunpack.c.l.b16 %v298
    %v1061 = vunpack.c.h.b16 %v298
    %v1062 = vunpack.c.l.b16 %v299
    %v1063 = vunpack.c.h.b16 %v299
    %v1064 = vunpack.c.l.b16 %v300
    %v1065 = vunpack.c.h.b16 %v300
    %v1066 = vunpack.c.l.b16 %v301
    %v1067 = vunpack.c.h.b16 %v301
    %v1068 = vunpack.c.l.b16 %v302
    %v1069 = vunpack.c.h.b16 %v302
    %v1070 = vunpack.c.l.b16 %v303
    %v1071 = vunpack.c.h.b16 %v303
    %v1072 = vunpack.c.l.b16 %v304
    %v1073 = vunpack.c.h.b16 %v304
    %v1074 = vunpack.c.l.b16 %v305
    %v1075 = vunpack.c.h.b16 %v305
    %v1076 = vunpack.c.l.b16 %v306
    %v1077 = vunpack.c.h.b16 %v306
    %v1078 = vunpack.c.l.b16 %v307
    %v1079 = vunpack.c.h.b16 %v307
    %v1080 = vunpack.c.l.b16 %v308
    %v1081 = vunpack.c.h.b16 %v308
    %v1082 = vunpack.c.l.b16 %v309
    %v1083 = vunpack.c.h.b16 %v309
    %v1084 = vunpack.c.l.b16 %v310
    %v1085 = vunpack.c.h.b16 %v310
    %v1086 = vunpack.c.l.b16 %v311
    %v1087 = vunpack.c.h.b16 %v311
    %v1088 = vunpack.c.l.b16 %v312
    %v1089 = vunpack.c.h.b16 %v312
    %v1090 = vunpack.c.l.b16 %v313
    %v1091 = vunpack.c.h.b16 %v313
    %v1092 = vunpack.c.l.b16 %v314
    %v1093 = vunpack.c.h.b16 %v314
    %v1094 = vunpack.c.l.b16 %v315
    %v1095 = vunpack.c.h.b16 %v315
    %v1096 = vunpack.c.l.b16 %v316
    %v1097 = vunpack.c.h.b16 %v316
    %v1098 = vunpack.c.l.b16 %v317
    %v1099 = vunpack.c.h.b16 %v317
    %v1100 = vunpack.c.l.b16 %v318
    %v1101 = vunpack.c.h.b16 %v318
    %v1102 = vunpack.c.l.b16 %v319
    %v1103 = vunpack.c.h.b16 %v319
    %v1104 = vunpack.c.l.b16 %v320
    %v1105 = vunpack.c.h.b16 %v320
    %v1106 = vunpack.c.l.b16 %v321
    %v1107 = vunpack.c.h.b16 %v321
    %v1108 = vunpack.c.l.b16 %v322
    %v1109 = vunpack.c.h.b16 %v322
    %v1110 = vunpack.c.l.b16 %v323
    %v1111 = vunpack.c.h.b16 %v323
    %v1112 = vunpack.c.l.b16 %v324
    %v1113 = vunpack.c.h.b16 %v324
    %v1114 = vunpack.c.l.b16 %v325
    %v1115 = vunpack.c.h.b16 %v325
    %v1116 = vunpack.c.l.b16 %v326
    %v1117 = vunpack.c.h.b16 %v326
    %v1118 = vunpack.c.l.b16 %v327
    %v1119 = vunpack.c.h.b16 %v327
    %v1120 = vunpack.c.l.b16 %v328
    %v1121 = vunpack.c.h.b16 %v328
    %v1122 = vunpack.c.l.b16 %v329
    %v1123 = vunpack.c.h.b16 %v329
    %v1124 = vunpack.c.l.b16 %v330
    %v1125 = vunpack.c.h.b16 %v330
    %v1126 = vunpack.c.l.b16 %v331
    %v1127 = vunpack.c.h.b16 %v331
    %v1128 = vpack.c.b16 %v620, %v616
    %v1129 = vpack.c.b16 %v621, %v617
    %v1130 = vpack.c.b16 %v622, %v618
    %v1131 = vpack.c.b16 %v623, %v619
    %v1132 = vpack.c.b16 %v628, %v624
    %v1133 = vpack.c.b16 %v629, %v625
    %v1134 = vpack.c.b16 %v630, %v626
    %v1135 = vpack.c.b16 %v631, %v627
    %v1136 = vpack.c.b16 %v636, %v632
    %v1137 = vpack.c.b16 %v637, %v633
    %v1138 = vpack.c.b16 %v638, %v634
    %v1139 = vpack.c.b16 %v639, %v635
    %v1140 = vpack.c.b16 %v644, %v640
    %v1141 = vpack.c.b16 %v645, %v641
    %v1142 = vpack.c.b16 %v646, %v642
    %v1143 = vpack.c.b16 %v647, %v643
    %v1144 = vpack.c.b16 %v652, %v648
    %v1145 = vpack.c.b16 %v653, %v649
    %v1146 = vpack.c.b16 %v654, %v650
    %v1147 = vpack.c.b16 %v655, %v651
    %v1148 = vpack.c.b16 %v660, %v656
    %v1149 = vpack.c.b16 %v661, %v657
    %v1150 = vpack.c.b16 %v662, %v658
    %v1151 = vpack.c.b16 %v663, %v659
    %v1152 = vpack.c.b16 %v668, %v664
    %v1153 = vpack.c.b16 %v669, %v665
    %v1154 = vpack.c.b16 %v670, %v666
    %v1155 = vpack.c.b16 %v671, %v667
    %v1156 = vpack.c.b16 %v676, %v672
    %v1157 = vpack.c.b16 %v677, %v673
    %v1158 = vpack.c.b16 %v678, %v674
    %v1159 = vpack.c.b16 %v679, %v675
    %v1160 = vpack.c.b16 %v684, %v680
    %v1161 = vpack.c.b16 %v685, %v681
    %v1162 = vpack.c.b16 %v686, %v682
    %v1163 = vpack.c.b16 %v687, %v683
    %v1164 = vpack.c.b16 %v692, %v688
    %v1165 = vpack.c.b16 %v693, %v689
    %v1166 = vpack.c.b16 %v694, %v690
    %v1167 = vpack.c.b16 %v695, %v691
    %v1168 = vpack.c.b16 %v700, %v696
    %v1169 = vpack.c.b16 %v701, %v697
    %v1170 = vpack.c.b16 %v702, %v698
    %v1171 = vpack.c.b16 %v703, %v699
    %v1172 = vpack.c.b16 %v708, %v704
    %v1173 = vpack.c.b16 %v709, %v705
    %v1174 = vpack.c.b16 %v710, %v706
    %v1175 = vpack.c.b16 %v711, %v707
    %v1176 = vpack.c.b16 %v716, %v712
    %v1177 = vpack.c.b16 %v717, %v713
    %v1178 = vpack.c.b16 %v718, %v714
    %v1179 = vpack.c.b16 %v719, %v715
    %v1180 = vpack.c.b16 %v724, %v720
    %v1181 = vpack.c.b16 %v725, %v721
    %v1182 = vpack.c.b16 %v726, %v722
    %v1183 = vpack.c.b16 %v727, %v723
    %v1184 = vpack.c.b16 %v732, %v728
    %v1185 = vpack.c.b16 %v733, %v729
    %v1186 = vpack.c.b16 %v734, %v730
    %v1187 = vpack.c.b16 %v735, %v731
    %v1188 = vpack.c.b16 %v740, %v736
    %v1189 = vpack.c.b16 %v741, %v737
    %v1190 = vpack.c.b16 %v742, %v738
    %v1191 = vpack.c.b16 %v743, %v739
    %v1192 = vpack.c.b16 %v748, %v744
    %v1193 = vpack.c.b16 %v749, %v745
    %v1194 = vpack.c.b16 %v750, %v746
    %v1195 = vpack.c.b16 %v751, %v747
    %v1196 = vpack.c.b16 %v756, %v752
    %v1197 = vpack.c.b16 %v757, %v753
    %v1198 = vpack.c.b16 %v758, %v754
    %v1199 = vpack.c.b16 %v759, %v755
    %v1200 = vpack.c.b16 %v764, %v760
    %v1201 = vpack.c.b16 %v765, %v761
    %v1202 = vpack.c.b16 %v766, %v762
    %v1203 = vpack.c.b16 %v767, %v763
    %v1204 = vpack.c.b16 %v772, %v768
    %v1205 = vpack.c.b16 %v773, %v769
    %v1206 = vpack.c.b16 %v774, %v770
    %v1207 = vpack.c.b16 %v775, %v771
    %v1208 = vpack.c.b16 %v780, %v776
    %v1209 = vpack.c.b16 %v781, %v777
    %v1210 = vpack.c.b16 %v782, %v778
    %v1211 = vpack.c.b16 %v783, %v779
    %v1212 = vpack.c.b16 %v788, %v784
    %v1213 = vpack.c.b16 %v789, %v785
    %v1214 = vpack.c.b16 %v790, %v786
    %v1215 = vpack.c.b16 %v791, %v787
    %v1216 = vpack.c.b16 %v796, %v792
    %v1217 = vpack.c.b16 %v797, %v793
    %v1218 = vpack.c.b16 %v798, %v794
    %v1219 = vpack.c.b16 %v799, %v795
    %v1220 = vpack.c.b16 %v804, %v800
    %v1221 = vpack.c.b16 %v805, %v801
    %v1222 = vpack.c.b16 %v806, %v802
    %v1223 = vpack.c.b16 %v807, %v803
    %v1224 = vpack.c.b16 %v812, %v808
    %v1225 = vpack.c.b16 %v813, %v809
    %v1226 = vpack.c.b16 %v814, %v810
    %v1227 = vpack.c.b16 %v815, %v811
    %v1228 = vpack.c.b16 %v820, %v816
    %v1229 = vpack.c.b16 %v821, %v817
    %v1230 = vpack.c.b16 %v822, %v818
    %v1231 = vpack.c.b16 %v823, %v819
    %v1232 = vpack.c.b16 %v828, %v824
    %v1233 = vpack.c.b16 %v829, %v825
    %v1234 = vpack.c.b16 %v830, %v826
    %v1235 = vpack.c.b16 %v831, %v827
    %v1236 = vpack.c.b16 %v836, %v832
    %v1237 = vpack.c.b16 %v837, %v833
    %v1238 = vpack.c.b16 %v838, %v834
    %v1239 = vpack.c.b16 %v839, %v835
    %v1240 = vpack.c.b16 %v844, %v840
    %v1241 = vpack.c.b16 %v845, %v841
    %v1242 = vpack.c.b16 %v846, %v842
    %v1243 = vpack.c.b16 %v847, %v843
    %v1244 = vpack.c.b16 %v852, %v848
    %v1245 = vpack.c.b16 %v853, %v849
    %v1246 = vpack.c.b16 %v854, %v850
    %v1247 = vpack.c.b16 %v855, %v851
    %v1248 = vpack.c.b16 %v860, %v856
    %v1249 = vpack.c.b16 %v861, %v857
    %v1250 = vpack.c.b16 %v862, %v858
    %v1251 = vpack.c.b16 %v863, %v859
    %v1252 = vpack.c.b16 %v868, %v864
    %v1253 = vpack.c.b16 %v869, %v865
    %v1254 = vpack.c.b16 %v870, %v866
    %v1255 = vpack.c.b16 %v871, %v867
    %v1256 = vpack.c.b16 %v876, %v872
    %v1257 = vpack.c.b16 %v877, %v873
    %v1258 = vpack.c.b16 %v878, %v874
    %v1259 = vpack.c.b16 %v879, %v875
    %v1260 = vpack.c.b16 %v884, %v880
    %v1261 = vpack.c.b16 %v885, %v881
    %v1262 = vpack.c.b16 %v886, %v882
    %v1263 = vpack.c.b16 %v887, %v883
    %v1264 = vpack.c.b16 %v892, %v888
    %v1265 = vpack.c.b16 %v893, %v889
    %v1266 = vpack.c.b16 %v894, %v890
    %v1267 = vpack.c.b16 %v895, %v891
    %v1268 = vpack.c.b16 %v900, %v896
    %v1269 = vpack.c.b16 %v901, %v897
    %v1270 = vpack.c.b16 %v902, %v898
    %v1271 = vpack.c.b16 %v903, %v899
    %v1272 = vpack.c.b16 %v908, %v904
    %v1273 = vpack.c.b16 %v909, %v905
    %v1274 = vpack.c.b16 %v910, %v906
    %v1275 = vpack.c.b16 %v911, %v907
    %v1276 = vpack.c.b16 %v916, %v912
    %v1277 = vpack.c.b16 %v917, %v913
    %v1278 = vpack.c.b16 %v918, %v914
    %v1279 = vpack.c.b16 %v919, %v915
    %v1280 = vpack.c.b16 %v924, %v920
    %v1281 = vpack.c.b16 %v925, %v921
    %v1282 = vpack.c.b16 %v926, %v922
    %v1283 = vpack.c.b16 %v927, %v923
    %v1284 = vpack.c.b16 %v932, %v928
    %v1285 = vpack.c.b16 %v933, %v929
    %v1286 = vpack.c.b16 %v934, %v930
    %v1287 = vpack.c.b16 %v935, %v931
    %v1288 = vpack.c.b16 %v940, %v936
    %v1289 = vpack.c.b16 %v941, %v937
    %v1290 = vpack.c.b16 %v942, %v938
    %v1291 = vpack.c.b16 %v943, %v939
    %v1292 = vpack.c.b16 %v948, %v944
    %v1293 = vpack.c.b16 %v949, %v945
    %v1294 = vpack.c.b16 %v950, %v946
    %v1295 = vpack.c.b16 %v951, %v947
    %v1296 = vpack.c.b16 %v956, %v952
    %v1297 = vpack.c.b16 %v957, %v953
    %v1298 = vpack.c.b16 %v958, %v954
    %v1299 = vpack.c.b16 %v959, %v955
    %v1300 = vpack.c.b16 %v964, %v960
    %v1301 = vpack.c.b16 %v965, %v961
    %v1302 = vpack.c.b16 %v966, %v962
    %v1303 = vpack.c.b16 %v967, %v963
    %v1304 = vpack.c.b16 %v972, %v968
    %v1305 = vpack.c.b16 %v973, %v969
    %v1306 = vpack.c.b16 %v974, %v970
    %v1307 = vpack.c.b16 %v975, %v971
    %v1308 = vpack.c.b16 %v980, %v976
    %v1309 = vpack.c.b16 %v981, %v977
    %v1310 = vpack.c.b16 %v982, %v978
    %v1311 = vpack.c.b16 %v983, %v979
    %v1312 = vpack.c.b16 %v988, %v984
    %v1313 = vpack.c.b16 %v989, %v985
    %v1314 = vpack.c.b16 %v990, %v986
    %v1315 = vpack.c.b16 %v991, %v987
    %v1316 = vpack.c.b16 %v996, %v992
    %v1317 = vpack.c.b16 %v997, %v993
    %v1318 = vpack.c.b16 %v998, %v994
    %v1319 = vpack.c.b16 %v999, %v995
    %v1320 = vpack.c.b16 %v1004, %v1000
    %v1321 = vpack.c.b16 %v1005, %v1001
    %v1322 = vpack.c.b16 %v1006, %v1002
    %v1323 = vpack.c.b16 %v1007, %v1003
    %v1324 = vpack.c.b16 %v1012, %v1008
    %v1325 = vpack.c.b16 %v1013, %v1009
    %v1326 = vpack.c.b16 %v1014, %v1010
    %v1327 = vpack.c.b16 %v1015, %v1011
    %v1328 = vpack.c.b16 %v1020, %v1016
    %v1329 = vpack.c.b16 %v1021, %v1017
    %v1330 = vpack.c.b16 %v1022, %v1018
    %v1331 = vpack.c.b16 %v1023, %v1019
    %v1332 = vpack.c.b16 %v1028, %v1024
    %v1333 = vpack.c.b16 %v1029, %v1025
    %v1334 = vpack.c.b16 %v1030, %v1026
    %v1335 = vpack.c.b16 %v1031, %v1027
    %v1336 = vpack.c.b16 %v1036, %v1032
    %v1337 = vpack.c.b16 %v1037, %v1033
    %v1338 = vpack.c.b16 %v1038, %v1034
    %v1339 = vpack.c.b16 %v1039, %v1035
    %v1340 = vpack.c.b16 %v1044, %v1040
    %v1341 = vpack.c.b16 %v1045, %v1041
    %v1342 = vpack.c.b16 %v1046, %v1042
    %v1343 = vpack.c.b16 %v1047, %v1043
    %v1344 = vpack.c.b16 %v1052, %v1048
    %v1345 = vpack.c.b16 %v1053, %v1049
    %v1346 = vpack.c.b16 %v1054, %v1050
    %v1347 = vpack.c.b16 %v1055, %v1051
    %v1348 = vpack.c.b16 %v1060, %v1056
    %v1349 = vpack.c.b16 %v1061, %v1057
    %v1350 = vpack.c.b16 %v1062, %v1058
    %v1351 = vpack.c.b16 %v1063, %v1059
    %v1352 = vpack.c.b16 %v1068, %v1064
    %v1353 = vpack.c.b16 %v1069, %v1065
    %v1354 = vpack.c.b16 %v1070, %v1066
    %v1355 = vpack.c.b16 %v1071, %v1067
    %v1356 = vpack.c.b16 %v1076, %v1072
    %v1357 = vpack.c.b16 %v1077, %v1073
    %v1358 = vpack.c.b16 %v1078, %v1074
    %v1359 = vpack.c.b16 %v1079, %v1075
    %v1360 = vpack.c.b16 %v1084, %v1080
    %v1361 = vpack.c.b16 %v1085, %v1081
    %v1362 = vpack.c.b16 %v1086, %v1082
    %v1363 = vpack.c.b16 %v1087, %v1083
    %v1364 = vpack.c.b16 %v1092, %v1088
    %v1365 = vpack.c.b16 %v1093, %v1089
    %v1366 = vpack.c.b16 %v1094, %v1090
    %v1367 = vpack.c.b16 %v1095, %v1091
    %v1368 = vpack.c.b16 %v1100, %v1096
    %v1369 = vpack.c.b16 %v1101, %v1097
    %v1370 = vpack.c.b16 %v1102, %v1098
    %v1371 = vpack.c.b16 %v1103, %v1099
    %v1372 = vpack.c.b16 %v1108, %v1104
    %v1373 = vpack.c.b16 %v1109, %v1105
    %v1374 = vpack.c.b16 %v1110, %v1106
    %v1375 = vpack.c.b16 %v1111, %v1107
    %v1376 = vpack.c.b16 %v1116, %v1112
    %v1377 = vpack.c.b16 %v1117, %v1113
    %v1378 = vpack.c.b16 %v1118, %v1114
    %v1379 = vpack.c.b16 %v1119, %v1115
    %v1380 = vpack.c.b16 %v1124, %v1120
    %v1381 = vpack.c.b16 %v1125, %v1121
    %v1382 = vpack.c.b16 %v1126, %v1122
    %v1383 = vpack.c.b16 %v1127, %v1123
    %1640 = vmatprep.subr.bf16.mxu0 %v1129
    %1641 = vmatpush1.bf16.msra.mxu0 %v1128
    %1642 = vmatprep.subr.bf16.mxu0 %v1133
    %1643 = vmatpush1.bf16.msra.mxu0 %v1132
    %1644 = vmatprep.subr.bf16.mxu0 %v1137
    %1645 = vmatpush1.bf16.msra.mxu0 %v1136
    %1646 = vmatprep.subr.bf16.mxu0 %v1141
    %1647 = vmatpush1.bf16.msra.mxu0 %v1140
    %1648 = vmatprep.subr.bf16.mxu0 %v1145
    %1649 = vmatpush1.bf16.msra.mxu0 %v1144
    %1650 = vmatprep.subr.bf16.mxu0 %v1149
    %1651 = vmatpush1.bf16.msra.mxu0 %v1148
    %1652 = vmatprep.subr.bf16.mxu0 %v1153
    %1653 = vmatpush1.bf16.msra.mxu0 %v1152
    %1654 = vmatprep.subr.bf16.mxu0 %v1157
    %1655 = vmatpush1.bf16.msra.mxu0 %v1156
    %1656 = vmatprep.subr.bf16.mxu0 %v1161
    %1657 = vmatpush1.bf16.msra.mxu0 %v1160
    %1658 = vmatprep.subr.bf16.mxu0 %v1165
    %1659 = vmatpush1.bf16.msra.mxu0 %v1164
    %1660 = vmatprep.subr.bf16.mxu0 %v1169
    %1661 = vmatpush1.bf16.msra.mxu0 %v1168
    %1662 = vmatprep.subr.bf16.mxu0 %v1173
    %1663 = vmatpush1.bf16.msra.mxu0 %v1172
    %1664 = vmatprep.subr.bf16.mxu0 %v1177
    %1665 = vmatpush1.bf16.msra.mxu0 %v1176
    %1666 = vmatprep.subr.bf16.mxu0 %v1181
    %1667 = vmatpush1.bf16.msra.mxu0 %v1180
    %1668 = vmatprep.subr.bf16.mxu0 %v1185
    %1669 = vmatpush1.bf16.msra.mxu0 %v1184
    %1670 = vmatprep.subr.bf16.mxu0 %v1189
    %1671 = vmatpush1.bf16.msra.mxu0 %v1188
    %1672 = vmatprep.mubr.bf16.mxu0 %v345
    %1673 = vmatmul.mubr.bf16.gmra.mrb[0].mxu0 %v344
    %v1674 = vpop.f32.mrb[0].mxu0
    %v1675 = vadd.f32 0.0, %v1674
    %v1676 = vpop.f32.mrb[0].mxu0
    %v1677 = vadd.f32 0.0, %v1676
    %v1678 = vpop.f32.mrb[0].mxu0
    %v1679 = vpop.f32.mrb[0].mxu0
    %1680 = vdwg.mxu0
    %1681 = vmatprep.subr.bf16.mxu0 %v1193
    %1682 = vmatpush1.bf16.msra.mxu0 %v1192
    %1683 = vmatprep.subr.bf16.mxu0 %v1197
    %1684 = vmatpush1.bf16.msra.mxu0 %v1196
    %1685 = vmatprep.subr.bf16.mxu0 %v1201
    %1686 = vmatpush1.bf16.msra.mxu0 %v1200
    %1687 = vmatprep.subr.bf16.mxu0 %v1205
    %1688 = vmatpush1.bf16.msra.mxu0 %v1204
    %1689 = vmatprep.subr.bf16.mxu0 %v1209
    %1690 = vmatpush1.bf16.msra.mxu0 %v1208
    %1691 = vmatprep.subr.bf16.mxu0 %v1213
    %1692 = vmatpush1.bf16.msra.mxu0 %v1212
    %1693 = vmatprep.subr.bf16.mxu0 %v1217
    %1694 = vmatpush1.bf16.msra.mxu0 %v1216
    %1695 = vmatprep.subr.bf16.mxu0 %v1221
    %1696 = vmatpush1.bf16.msra.mxu0 %v1220
    %1697 = vmatprep.subr.bf16.mxu0 %v1225
    %1698 = vmatpush1.bf16.msra.mxu0 %v1224
    %1699 = vmatprep.subr.bf16.mxu0 %v1229
    %1700 = vmatpush1.bf16.msra.mxu0 %v1228
    %1701 = vmatprep.subr.bf16.mxu0 %v1233
    %1702 = vmatpush1.bf16.msra.mxu0 %v1232
    %1703 = vmatprep.subr.bf16.mxu0 %v1237
    %1704 = vmatpush1.bf16.msra.mxu0 %v1236
    %1705 = vmatprep.subr.bf16.mxu0 %v1241
    %1706 = vmatpush1.bf16.msra.mxu0 %v1240
    %1707 = vmatprep.subr.bf16.mxu0 %v1245
    %1708 = vmatpush1.bf16.msra.mxu0 %v1244
    %1709 = vmatprep.subr.bf16.mxu0 %v1249
    %1710 = vmatpush1.bf16.msra.mxu0 %v1248
    %1711 = vmatprep.subr.bf16.mxu0 %v1253
    %1712 = vmatpush1.bf16.msra.mxu0 %v1252
    %1713 = vmatprep.mubr.bf16.mxu0 %v347
    %1714 = vmatmul.mubr.bf16.gmra.mrb[0].mxu0 %v346
    %v1715 = vpop.f32.mrb[0].mxu0
    %v1716 = vadd.f32 %v1675, %v1715
    %v1717 = vpop.f32.mrb[0].mxu0
    %v1718 = vadd.f32 %v1677, %v1717
    %v1719 = vpop.f32.mrb[0].mxu0
    %v1720 = vpop.f32.mrb[0].mxu0
    %1721 = vdwg.mxu0
    %1722 = vmatprep.subr.bf16.mxu0 %v1257
    %1723 = vmatpush1.bf16.msra.mxu0 %v1256
    %1724 = vmatprep.subr.bf16.mxu0 %v1261
    %1725 = vmatpush1.bf16.msra.mxu0 %v1260
    %1726 = vmatprep.subr.bf16.mxu0 %v1265
    %1727 = vmatpush1.bf16.msra.mxu0 %v1264
    %1728 = vmatprep.subr.bf16.mxu0 %v1269
    %1729 = vmatpush1.bf16.msra.mxu0 %v1268
    %1730 = vmatprep.subr.bf16.mxu0 %v1273
    %1731 = vmatpush1.bf16.msra.mxu0 %v1272
    %1732 = vmatprep.subr.bf16.mxu0 %v1277
    %1733 = vmatpush1.bf16.msra.mxu0 %v1276
    %1734 = vmatprep.subr.bf16.mxu0 %v1281
    %1735 = vmatpush1.bf16.msra.mxu0 %v1280
    %1736 = vmatprep.subr.bf16.mxu0 %v1285
    %1737 = vmatpush1.bf16.msra.mxu0 %v1284
    %1738 = vmatprep.subr.bf16.mxu0 %v1289
    %1739 = vmatpush1.bf16.msra.mxu0 %v1288
    %1740 = vmatprep.subr.bf16.mxu0 %v1293
    %1741 = vmatpush1.bf16.msra.mxu0 %v1292
    %1742 = vmatprep.subr.bf16.mxu0 %v1297
    %1743 = vmatpush1.bf16.msra.mxu0 %v1296
    %1744 = vmatprep.subr.bf16.mxu0 %v1301
    %1745 = vmatpush1.bf16.msra.mxu0 %v1300
    %1746 = vmatprep.subr.bf16.mxu0 %v1305
    %1747 = vmatpush1.bf16.msra.mxu0 %v1304
    %1748 = vmatprep.subr.bf16.mxu0 %v1309
    %1749 = vmatpush1.bf16.msra.mxu0 %v1308
    %1750 = vmatprep.subr.bf16.mxu0 %v1313
    %1751 = vmatpush1.bf16.msra.mxu0 %v1312
    %1752 = vmatprep.subr.bf16.mxu0 %v1317
    %1753 = vmatpush1.bf16.msra.mxu0 %v1316
    %1754 = vmatprep.mubr.bf16.mxu0 %v349
    %1755 = vmatmul.mubr.bf16.gmra.mrb[0].mxu0 %v348
    %v1756 = vpop.f32.mrb[0].mxu0
    %v1757 = vadd.f32 %v1716, %v1756
    %v1758 = vpop.f32.mrb[0].mxu0
    %v1759 = vadd.f32 %v1718, %v1758
    %v1760 = vpop.f32.mrb[0].mxu0
    %v1761 = vpop.f32.mrb[0].mxu0
    %1762 = vdwg.mxu0
    %1763 = vmatprep.subr.bf16.mxu0 %v1321
    %1764 = vmatpush1.bf16.msra.mxu0 %v1320
    %1765 = vmatprep.subr.bf16.mxu0 %v1325
    %1766 = vmatpush1.bf16.msra.mxu0 %v1324
    %1767 = vmatprep.subr.bf16.mxu0 %v1329
    %1768 = vmatpush1.bf16.msra.mxu0 %v1328
    %1769 = vmatprep.subr.bf16.mxu0 %v1333
    %1770 = vmatpush1.bf16.msra.mxu0 %v1332
    %1771 = vmatprep.subr.bf16.mxu0 %v1337
    %1772 = vmatpush1.bf16.msra.mxu0 %v1336
    %1773 = vmatprep.subr.bf16.mxu0 %v1341
    %1774 = vmatpush1.bf16.msra.mxu0 %v1340
    %1775 = vmatprep.subr.bf16.mxu0 %v1345
    %1776 = vmatpush1.bf16.msra.mxu0 %v1344
    %1777 = vmatprep.subr.bf16.mxu0 %v1349
    %1778 = vmatpush1.bf16.msra.mxu0 %v1348
    %1779 = vmatprep.subr.bf16.mxu0 %v1353
    %1780 = vmatpush1.bf16.msra.mxu0 %v1352
    %1781 = vmatprep.subr.bf16.mxu0 %v1357
    %1782 = vmatpush1.bf16.msra.mxu0 %v1356
    %1783 = vmatprep.subr.bf16.mxu0 %v1361
    %1784 = vmatpush1.bf16.msra.mxu0 %v1360
    %1785 = vmatprep.subr.bf16.mxu0 %v1365
    %1786 = vmatpush1.bf16.msra.mxu0 %v1364
    %1787 = vmatprep.subr.bf16.mxu0 %v1369
    %1788 = vmatpush1.bf16.msra.mxu0 %v1368
    %1789 = vmatprep.subr.bf16.mxu0 %v1373
    %1790 = vmatpush1.bf16.msra.mxu0 %v1372
    %1791 = vmatprep.subr.bf16.mxu0 %v1377
    %1792 = vmatpush1.bf16.msra.mxu0 %v1376
    %1793 = vmatprep.subr.bf16.mxu0 %v1381
    %1794 = vmatpush1.bf16.msra.mxu0 %v1380
    %1795 = vmatprep.mubr.bf16.mxu0 %v351
    %1796 = vmatmul.mubr.bf16.gmra.mrb[0].mxu0 %v350
    %v1797 = vpop.f32.mrb[0].mxu0
    %v1798 = vadd.f32 %v1757, %v1797
    %v1799 = vpop.f32.mrb[0].mxu0
    %v1800 = vadd.f32 %v1759, %v1799
    %v1801 = vpop.f32.mrb[0].mxu0
    %v1802 = vpop.f32.mrb[0].mxu0
    %1803 = vdwg.mxu0
    %1804 = vmatprep.subr.bf16.mxu0 %v1131
    %1805 = vmatpush1.bf16.msra.mxu0 %v1130
    %1806 = vmatprep.subr.bf16.mxu0 %v1135
    %1807 = vmatpush1.bf16.msra.mxu0 %v1134
    %1808 = vmatprep.subr.bf16.mxu0 %v1139
    %1809 = vmatpush1.bf16.msra.mxu0 %v1138
    %1810 = vmatprep.subr.bf16.mxu0 %v1143
    %1811 = vmatpush1.bf16.msra.mxu0 %v1142
    %1812 = vmatprep.subr.bf16.mxu0 %v1147
    %1813 = vmatpush1.bf16.msra.mxu0 %v1146
    %1814 = vmatprep.subr.bf16.mxu0 %v1151
    %1815 = vmatpush1.bf16.msra.mxu0 %v1150
    %1816 = vmatprep.subr.bf16.mxu0 %v1155
    %1817 = vmatpush1.bf16.msra.mxu0 %v1154
    %1818 = vmatprep.subr.bf16.mxu0 %v1159
    %1819 = vmatpush1.bf16.msra.mxu0 %v1158
    %1820 = vmatprep.subr.bf16.mxu0 %v1163
    %1821 = vmatpush1.bf16.msra.mxu0 %v1162
    %1822 = vmatprep.subr.bf16.mxu0 %v1167
    %1823 = vmatpush1.bf16.msra.mxu0 %v1166
    %1824 = vmatprep.subr.bf16.mxu0 %v1171
    %1825 = vmatpush1.bf16.msra.mxu0 %v1170
    %1826 = vmatprep.subr.bf16.mxu0 %v1175
    %1827 = vmatpush1.bf16.msra.mxu0 %v1174
    %1828 = vmatprep.subr.bf16.mxu0 %v1179
    %1829 = vmatpush1.bf16.msra.mxu0 %v1178
    %1830 = vmatprep.subr.bf16.mxu0 %v1183
    %1831 = vmatpush1.bf16.msra.mxu0 %v1182
    %1832 = vmatprep.subr.bf16.mxu0 %v1187
    %1833 = vmatpush1.bf16.msra.mxu0 %v1186
    %1834 = vmatprep.subr.bf16.mxu0 %v1191
    %1835 = vmatpush1.bf16.msra.mxu0 %v1190
    %1836 = vmatprep.mubr.bf16.mxu0 %v345
    %1837 = vmatmul.mubr.bf16.gmra.mrb[0].mxu0 %v344
    %v1838 = vpop.f32.mrb[0].mxu0
    %v1839 = vadd.f32 0.0, %v1838
    %v1840 = vpop.f32.mrb[0].mxu0
    %v1841 = vadd.f32 0.0, %v1840
    %v1842 = vpop.f32.mrb[0].mxu0
    %v1843 = vpop.f32.mrb[0].mxu0
    %1844 = vdwg.mxu0
    %1845 = vmatprep.subr.bf16.mxu0 %v1195
    %1846 = vmatpush1.bf16.msra.mxu0 %v1194
    %1847 = vmatprep.subr.bf16.mxu0 %v1199
    %1848 = vmatpush1.bf16.msra.mxu0 %v1198
    %1849 = vmatprep.subr.bf16.mxu0 %v1203
    %1850 = vmatpush1.bf16.msra.mxu0 %v1202
    %1851 = vmatprep.subr.bf16.mxu0 %v1207
    %1852 = vmatpush1.bf16.msra.mxu0 %v1206
    %1853 = vmatprep.subr.bf16.mxu0 %v1211
    %1854 = vmatpush1.bf16.msra.mxu0 %v1210
    %1855 = vmatprep.subr.bf16.mxu0 %v1215
    %1856 = vmatpush1.bf16.msra.mxu0 %v1214
    %1857 = vmatprep.subr.bf16.mxu0 %v1219
    %1858 = vmatpush1.bf16.msra.mxu0 %v1218
    %1859 = vmatprep.subr.bf16.mxu0 %v1223
    %1860 = vmatpush1.bf16.msra.mxu0 %v1222
    %1861 = vmatprep.subr.bf16.mxu0 %v1227
    %1862 = vmatpush1.bf16.msra.mxu0 %v1226
    %1863 = vmatprep.subr.bf16.mxu0 %v1231
    %1864 = vmatpush1.bf16.msra.mxu0 %v1230
    %1865 = vmatprep.subr.bf16.mxu0 %v1235
    %1866 = vmatpush1.bf16.msra.mxu0 %v1234
    %1867 = vmatprep.subr.bf16.mxu0 %v1239
    %1868 = vmatpush1.bf16.msra.mxu0 %v1238
    %1869 = vmatprep.subr.bf16.mxu0 %v1243
    %1870 = vmatpush1.bf16.msra.mxu0 %v1242
    %1871 = vmatprep.subr.bf16.mxu0 %v1247
    %1872 = vmatpush1.bf16.msra.mxu0 %v1246
    %1873 = vmatprep.subr.bf16.mxu0 %v1251
    %1874 = vmatpush1.bf16.msra.mxu0 %v1250
    %1875 = vmatprep.subr.bf16.mxu0 %v1255
    %1876 = vmatpush1.bf16.msra.mxu0 %v1254
    %1877 = vmatprep.mubr.bf16.mxu0 %v347
    %1878 = vmatmul.mubr.bf16.gmra.mrb[0].mxu0 %v346
    %v1879 = vpop.f32.mrb[0].mxu0
    %v1880 = vadd.f32 %v1839, %v1879
    %v1881 = vpop.f32.mrb[0].mxu0
    %v1882 = vadd.f32 %v1841, %v1881
    %v1883 = vpop.f32.mrb[0].mxu0
    %v1884 = vpop.f32.mrb[0].mxu0
    %1885 = vdwg.mxu0
    %1886 = vmatprep.subr.bf16.mxu0 %v1259
    %1887 = vmatpush1.bf16.msra.mxu0 %v1258
    %1888 = vmatprep.subr.bf16.mxu0 %v1263
    %1889 = vmatpush1.bf16.msra.mxu0 %v1262
    %1890 = vmatprep.subr.bf16.mxu0 %v1267
    %1891 = vmatpush1.bf16.msra.mxu0 %v1266
    %1892 = vmatprep.subr.bf16.mxu0 %v1271
    %1893 = vmatpush1.bf16.msra.mxu0 %v1270
    %1894 = vmatprep.subr.bf16.mxu0 %v1275
    %1895 = vmatpush1.bf16.msra.mxu0 %v1274
    %1896 = vmatprep.subr.bf16.mxu0 %v1279
    %1897 = vmatpush1.bf16.msra.mxu0 %v1278
    %1898 = vmatprep.subr.bf16.mxu0 %v1283
    %1899 = vmatpush1.bf16.msra.mxu0 %v1282
    %1900 = vmatprep.subr.bf16.mxu0 %v1287
    %1901 = vmatpush1.bf16.msra.mxu0 %v1286
    %1902 = vmatprep.subr.bf16.mxu0 %v1291
    %1903 = vmatpush1.bf16.msra.mxu0 %v1290
    %1904 = vmatprep.subr.bf16.mxu0 %v1295
    %1905 = vmatpush1.bf16.msra.mxu0 %v1294
    %1906 = vmatprep.subr.bf16.mxu0 %v1299
    %1907 = vmatpush1.bf16.msra.mxu0 %v1298
    %1908 = vmatprep.subr.bf16.mxu0 %v1303
    %1909 = vmatpush1.bf16.msra.mxu0 %v1302
    %1910 = vmatprep.subr.bf16.mxu0 %v1307
    %1911 = vmatpush1.bf16.msra.mxu0 %v1306
    %1912 = vmatprep.subr.bf16.mxu0 %v1311
    %1913 = vmatpush1.bf16.msra.mxu0 %v1310
    %1914 = vmatprep.subr.bf16.mxu0 %v1315
    %1915 = vmatpush1.bf16.msra.mxu0 %v1314
    %1916 = vmatprep.subr.bf16.mxu0 %v1319
    %1917 = vmatpush1.bf16.msra.mxu0 %v1318
    %1918 = vmatprep.mubr.bf16.mxu0 %v349
    %1919 = vmatmul.mubr.bf16.gmra.mrb[0].mxu0 %v348
    %v1920 = vpop.f32.mrb[0].mxu0
    %v1921 = vadd.f32 %v1880, %v1920
    %v1922 = vpop.f32.mrb[0].mxu0
    %v1923 = vadd.f32 %v1882, %v1922
    %v1924 = vpop.f32.mrb[0].mxu0
    %v1925 = vpop.f32.mrb[0].mxu0
    %1926 = vdwg.mxu0
    %1927 = vmatprep.subr.bf16.mxu0 %v1323
    %1928 = vmatpush1.bf16.msra.mxu0 %v1322
    %1929 = vmatprep.subr.bf16.mxu0 %v1327
    %1930 = vmatpush1.bf16.msra.mxu0 %v1326
    %1931 = vmatprep.subr.bf16.mxu0 %v1331
    %1932 = vmatpush1.bf16.msra.mxu0 %v1330
    %1933 = vmatprep.subr.bf16.mxu0 %v1335
    %1934 = vmatpush1.bf16.msra.mxu0 %v1334
    %1935 = vmatprep.subr.bf16.mxu0 %v1339
    %1936 = vmatpush1.bf16.msra.mxu0 %v1338
    %1937 = vmatprep.subr.bf16.mxu0 %v1343
    %1938 = vmatpush1.bf16.msra.mxu0 %v1342
    %1939 = vmatprep.subr.bf16.mxu0 %v1347
    %1940 = vmatpush1.bf16.msra.mxu0 %v1346
    %1941 = vmatprep.subr.bf16.mxu0 %v1351
    %1942 = vmatpush1.bf16.msra.mxu0 %v1350
    %1943 = vmatprep.subr.bf16.mxu0 %v1355
    %1944 = vmatpush1.bf16.msra.mxu0 %v1354
    %1945 = vmatprep.subr.bf16.mxu0 %v1359
    %1946 = vmatpush1.bf16.msra.mxu0 %v1358
    %1947 = vmatprep.subr.bf16.mxu0 %v1363
    %1948 = vmatpush1.bf16.msra.mxu0 %v1362
    %1949 = vmatprep.subr.bf16.mxu0 %v1367
    %1950 = vmatpush1.bf16.msra.mxu0 %v1366
    %1951 = vmatprep.subr.bf16.mxu0 %v1371
    %1952 = vmatpush1.bf16.msra.mxu0 %v1370
    %1953 = vmatprep.subr.bf16.mxu0 %v1375
    %1954 = vmatpush1.bf16.msra.mxu0 %v1374
    %1955 = vmatprep.subr.bf16.mxu0 %v1379
    %1956 = vmatpush1.bf16.msra.mxu0 %v1378
    %1957 = vmatprep.subr.bf16.mxu0 %v1383
    %1958 = vmatpush1.bf16.msra.mxu0 %v1382
    %1959 = vmatprep.mubr.bf16.mxu0 %v351
    %1960 = vmatmul.mubr.bf16.gmra.mrb[0].mxu0 %v350
    %v1961 = vpop.f32.mrb[0].mxu0
    %v1962 = vadd.f32 %v1921, %v1961
    %v1963 = vpop.f32.mrb[0].mxu0
    %v1964 = vadd.f32 %v1923, %v1963
    %v1965 = vpop.f32.mrb[0].mxu0
    %v1966 = vpop.f32.mrb[0].mxu0
    %1967 = vdwg.mxu0
    %v1968 = vadd.f32 %v68, %v1798
    %v1969 = vadd.f32 %v69, %v1800
    %v1970 = vadd.f32 %v70, %v1962
    %v1971 = vadd.f32 %v71, %v1964
    %1972 = vst [vmem:[#allocation2] sm:$0xff] %v1968
    %1973 = vst [vmem:[#allocation2 + $0x8] sm:$0xff] %v1969
    %1974 = vst [vmem:[#allocation2 + $0x10] sm:$0xff] %v1970
    %1975 = vst [vmem:[#allocation2 + $0x18] sm:$0xff] %v1971
    // Predicated region
    $region38: #{tpu_custom_call.1} parent=1 // pred_check
      %p1976 = pneg %p60
    $region39: #{tpu_custom_call.1} parent=1 // pred_check_branch
      %1978 = sbr.rel (%p1976) target = $region41
    $region40: #{tpu_custom_call.1} parent=1 // pred_region
      %v1979 = vld [vmem:[#allocation2] sm:$0xff]
      %v1980 = vld [vmem:[#allocation2 + $0x8] sm:$0xff]
      %v1981 = vld [vmem:[#allocation2 + $0x10] sm:$0xff]
      %v1982 = vld [vmem:[#allocation2 + $0x18] sm:$0xff]
      %v1983 = vld [vmem:[%s2] sm:$0xf]
      %v1985 = vlaneseq
      %v1986 = vshrl.u32 %v1985, 7
      %v1987 = vsub.s32 0, %v1986
      %v1988 = vrot.slane %v1983, %v1987
      %v1989 = vlaneseq
      %v1990 = vshrl.u32 %v1989, 7
      %v1991 = vsub.s32 1, %v1990
      %v1992 = vrot.slane %v1983, %v1991
      %v1993 = vlaneseq
      %v1994 = vshrl.u32 %v1993, 7
      %v1995 = vsub.s32 2, %v1994
      %v1996 = vrot.slane %v1983, %v1995
      %v1997 = vlaneseq
      %v1998 = vshrl.u32 %v1997, 7
      %v1999 = vsub.s32 3, %v1998
      %v2000 = vrot.slane %v1983, %v1999
      %v2005 = vadd.f32 %v1979, %v1988
      %v2006 = vadd.f32 %v1980, %v1992
      %v2007 = vadd.f32 %v1981, %v1996
      %v2008 = vadd.f32 %v1982, %v2000
      %v2009 = vld [vmem:[#allocation8] sm:$0xff]
      %v2010 = vld [vmem:[#allocation8 + $0x8] sm:$0xff]
      %v2011 = vld [vmem:[#allocation8 + $0x10] sm:$0xff]
      %v2012 = vld [vmem:[#allocation8 + $0x18] sm:$0xff]
      %v2013 = vld [vmem:[#allocation8 + $0x20] sm:$0xff]
      %v2014 = vld [vmem:[#allocation8 + $0x28] sm:$0xff]
      %v2015 = vld [vmem:[#allocation8 + $0x30] sm:$0xff]
      %v2016 = vld [vmem:[#allocation8 + $0x38] sm:$0xff]
      %v2017 = vld [vmem:[#allocation8 + $0x40] sm:$0xff]
      %v2018 = vld [vmem:[#allocation8 + $0x48] sm:$0xff]
      %v2019 = vld [vmem:[#allocation8 + $0x50] sm:$0xff]
      %v2020 = vld [vmem:[#allocation8 + $0x58] sm:$0xff]
      %v2021 = vld [vmem:[#allocation8 + $0x60] sm:$0xff]
      %v2022 = vld [vmem:[#allocation8 + $0x68] sm:$0xff]
      %v2023 = vld [vmem:[#allocation8 + $0x70] sm:$0xff]
      %v2024 = vld [vmem:[#allocation8 + $0x78] sm:$0xff]
      %v2025 = vld [vmem:[#allocation8 + $0x80] sm:$0xff]
      %v2026 = vld [vmem:[#allocation8 + $0x88] sm:$0xff]
      %v2027 = vld [vmem:[#allocation8 + $0x90] sm:$0xff]
      %v2028 = vld [vmem:[#allocation8 + $0x98] sm:$0xff]
      %v2029 = vld [vmem:[#allocation8 + $0xa0] sm:$0xff]
      %v2030 = vld [vmem:[#allocation8 + $0xa8] sm:$0xff]
      %v2031 = vld [vmem:[#allocation8 + $0xb0] sm:$0xff]
      %v2032 = vld [vmem:[#allocation8 + $0xb8] sm:$0xff]
      %v2033 = vld [vmem:[#allocation8 + $0xc0] sm:$0xff]
      %v2034 = vld [vmem:[#allocation8 + $0xc8] sm:$0xff]
      %v2035 = vld [vmem:[#allocation8 + $0xd0] sm:$0xff]
      %v2036 = vld [vmem:[#allocation8 + $0xd8] sm:$0xff]
      %v2037 = vld [vmem:[#allocation8 + $0xe0] sm:$0xff]
      %v2038 = vld [vmem:[#allocation8 + $0xe8] sm:$0xff]
      %v2039 = vld [vmem:[#allocation8 + $0xf0] sm:$0xff]
      %v2040 = vld [vmem:[#allocation8 + $0xf8] sm:$0xff]
      %v2041 = vld [vmem:[#allocation8 + $0x100] sm:$0xff]
      %v2042 = vld [vmem:[#allocation8 + $0x108] sm:$0xff]
      %v2043 = vld [vmem:[#allocation8 + $0x110] sm:$0xff]
      %v2044 = vld [vmem:[#allocation8 + $0x118] sm:$0xff]
      %v2045 = vld [vmem:[#allocation8 + $0x120] sm:$0xff]
      %v2046 = vld [vmem:[#allocation8 + $0x128] sm:$0xff]
      %v2047 = vld [vmem:[#allocation8 + $0x130] sm:$0xff]
      %v2048 = vld [vmem:[#allocation8 + $0x138] sm:$0xff]
      %v2049 = vld [vmem:[#allocation8 + $0x140] sm:$0xff]
      %v2050 = vld [vmem:[#allocation8 + $0x148] sm:$0xff]
      %v2051 = vld [vmem:[#allocation8 + $0x150] sm:$0xff]
      %v2052 = vld [vmem:[#allocation8 + $0x158] sm:$0xff]
      %v2053 = vld [vmem:[#allocation8 + $0x160] sm:$0xff]
      %v2054 = vld [vmem:[#allocation8 + $0x168] sm:$0xff]
      %v2055 = vld [vmem:[#allocation8 + $0x170] sm:$0xff]
      %v2056 = vld [vmem:[#allocation8 + $0x178] sm:$0xff]
      %v2057 = vld [vmem:[#allocation8 + $0x180] sm:$0xff]
      %v2058 = vld [vmem:[#allocation8 + $0x188] sm:$0xff]
      %v2059 = vld [vmem:[#allocation8 + $0x190] sm:$0xff]
      %v2060 = vld [vmem:[#allocation8 + $0x198] sm:$0xff]
      %v2061 = vld [vmem:[#allocation8 + $0x1a0] sm:$0xff]
      %v2062 = vld [vmem:[#allocation8 + $0x1a8] sm:$0xff]
      %v2063 = vld [vmem:[#allocation8 + $0x1b0] sm:$0xff]
      %v2064 = vld [vmem:[#allocation8 + $0x1b8] sm:$0xff]
      %v2065 = vld [vmem:[#allocation8 + $0x1c0] sm:$0xff]
      %v2066 = vld [vmem:[#allocation8 + $0x1c8] sm:$0xff]
      %v2067 = vld [vmem:[#allocation8 + $0x1d0] sm:$0xff]
      %v2068 = vld [vmem:[#allocation8 + $0x1d8] sm:$0xff]
      %v2069 = vld [vmem:[#allocation8 + $0x1e0] sm:$0xff]
      %v2070 = vld [vmem:[#allocation8 + $0x1e8] sm:$0xff]
      %v2071 = vld [vmem:[#allocation8 + $0x1f0] sm:$0xff]
      %v2072 = vld [vmem:[#allocation8 + $0x1f8] sm:$0xff]
      %v2073 = vld [vmem:[%s4] sm:$0x1]
      %v2075 = vlaneseq
      %v2076 = vshrl.u32 %v2075, 7
      %v2077 = vsub.s32 0, %v2076
      %v2078 = vrot.slane %v2073, %v2077
      %2080 = vmatprep.subr.mxu0 0.0
      %2081 = vmatpush1.msra.mxu0 %v2009
      %2082 = vmatprep.subr.mxu0 0.0
      %2083 = vmatpush1.msra.mxu0 %v2010
      %2084 = vmatprep.subr.mxu0 0.0
      %2085 = vmatpush1.msra.mxu0 %v2011
      %2086 = vmatprep.subr.mxu0 0.0
      %2087 = vmatpush1.msra.mxu0 %v2012
      %2088 = vmatprep.subr.mxu0 0.0
      %2089 = vmatpush1.msra.mxu0 %v2013
      %2090 = vmatprep.subr.mxu0 0.0
      %2091 = vmatpush1.msra.mxu0 %v2014
      %2092 = vmatprep.subr.mxu0 0.0
      %2093 = vmatpush1.msra.mxu0 %v2015
      %2094 = vmatprep.subr.mxu0 0.0
      %2095 = vmatpush1.msra.mxu0 %v2016
      %2096 = vmatprep.subr.mxu0 0.0
      %2097 = vmatpush1.msra.mxu0 %v2017
      %2098 = vmatprep.subr.mxu0 0.0
      %2099 = vmatpush1.msra.mxu0 %v2018
      %2100 = vmatprep.subr.mxu0 0.0
      %2101 = vmatpush1.msra.mxu0 %v2019
      %2102 = vmatprep.subr.mxu0 0.0
      %2103 = vmatpush1.msra.mxu0 %v2020
      %2104 = vmatprep.subr.mxu0 0.0
      %2105 = vmatpush1.msra.mxu0 %v2021
      %2106 = vmatprep.subr.mxu0 0.0
      %2107 = vmatpush1.msra.mxu0 %v2022
      %2108 = vmatprep.subr.mxu0 0.0
      %2109 = vmatpush1.msra.mxu0 %v2023
      %2110 = vmatprep.subr.mxu0 0.0
      %2111 = vmatpush1.msra.mxu0 %v2024
      %2112 = vmatprep.subr.mxu0 0.0
      %2113 = vmatpush1.msra.mxu0 %v2025
      %2114 = vmatprep.subr.mxu0 0.0
      %2115 = vmatpush1.msra.mxu0 %v2026
      %2116 = vmatprep.subr.mxu0 0.0
      %2117 = vmatpush1.msra.mxu0 %v2027
      %2118 = vmatprep.subr.mxu0 0.0
      %2119 = vmatpush1.msra.mxu0 %v2028
      %2120 = vmatprep.subr.mxu0 0.0
      %2121 = vmatpush1.msra.mxu0 %v2029
      %2122 = vmatprep.subr.mxu0 0.0
      %2123 = vmatpush1.msra.mxu0 %v2030
      %2124 = vmatprep.subr.mxu0 0.0
      %2125 = vmatpush1.msra.mxu0 %v2031
      %2126 = vmatprep.subr.mxu0 0.0
      %2127 = vmatpush1.msra.mxu0 %v2032
      %2128 = vmatprep.subr.mxu0 0.0
      %2129 = vmatpush1.msra.mxu0 %v2033
      %2130 = vmatprep.subr.mxu0 0.0
      %2131 = vmatpush1.msra.mxu0 %v2034
      %2132 = vmatprep.subr.mxu0 0.0
      %2133 = vmatpush1.msra.mxu0 %v2035
      %2134 = vmatprep.subr.mxu0 0.0
      %2135 = vmatpush1.msra.mxu0 %v2036
      %2136 = vmatprep.subr.mxu0 0.0
      %2137 = vmatpush1.msra.mxu0 %v2037
      %2138 = vmatprep.subr.mxu0 0.0
      %2139 = vmatpush1.msra.mxu0 %v2038
      %2140 = vmatprep.subr.mxu0 0.0
      %2141 = vmatpush1.msra.mxu0 %v2039
      %2142 = vmatprep.subr.mxu0 0.0
      %2143 = vmatpush1.msra.mxu0 %v2040
      %2144 = vmatprep.mubr.f32.mxu0 %v2006
      %2145 = vmatmul.mubr.f32.gmra.mrb[0].mxu0 %v2005
      %v2146 = vpop.f32.mrb[0].mxu0
      %v2147 = vadd.f32 %v2078, %v2146
      %v2148 = vpop.f32.mrb[0].mxu0
      %2149 = vdwg.mxu0
      %2150 = vmatprep.subr.mxu0 0.0
      %2151 = vmatpush1.msra.mxu0 %v2041
      %2152 = vmatprep.subr.mxu0 0.0
      %2153 = vmatpush1.msra.mxu0 %v2042
      %2154 = vmatprep.subr.mxu0 0.0
      %2155 = vmatpush1.msra.mxu0 %v2043
      %2156 = vmatprep.subr.mxu0 0.0
      %2157 = vmatpush1.msra.mxu0 %v2044
      %2158 = vmatprep.subr.mxu0 0.0
      %2159 = vmatpush1.msra.mxu0 %v2045
      %2160 = vmatprep.subr.mxu0 0.0
      %2161 = vmatpush1.msra.mxu0 %v2046
      %2162 = vmatprep.subr.mxu0 0.0
      %2163 = vmatpush1.msra.mxu0 %v2047
      %2164 = vmatprep.subr.mxu0 0.0
      %2165 = vmatpush1.msra.mxu0 %v2048
      %2166 = vmatprep.subr.mxu0 0.0
      %2167 = vmatpush1.msra.mxu0 %v2049
      %2168 = vmatprep.subr.mxu0 0.0
      %2169 = vmatpush1.msra.mxu0 %v2050
      %2170 = vmatprep.subr.mxu0 0.0
      %2171 = vmatpush1.msra.mxu0 %v2051
      %2172 = vmatprep.subr.mxu0 0.0
      %2173 = vmatpush1.msra.mxu0 %v2052
      %2174 = vmatprep.subr.mxu0 0.0
      %2175 = vmatpush1.msra.mxu0 %v2053
      %2176 = vmatprep.subr.mxu0 0.0
      %2177 = vmatpush1.msra.mxu0 %v2054
      %2178 = vmatprep.subr.mxu0 0.0
      %2179 = vmatpush1.msra.mxu0 %v2055
      %2180 = vmatprep.subr.mxu0 0.0
      %2181 = vmatpush1.msra.mxu0 %v2056
      %2182 = vmatprep.subr.mxu0 0.0
      %2183 = vmatpush1.msra.mxu0 %v2057
      %2184 = vmatprep.subr.mxu0 0.0
      %2185 = vmatpush1.msra.mxu0 %v2058
      %2186 = vmatprep.subr.mxu0 0.0
      %2187 = vmatpush1.msra.mxu0 %v2059
      %2188 = vmatprep.subr.mxu0 0.0
      %2189 = vmatpush1.msra.mxu0 %v2060
      %2190 = vmatprep.subr.mxu0 0.0
      %2191 = vmatpush1.msra.mxu0 %v2061
      %2192 = vmatprep.subr.mxu0 0.0
      %2193 = vmatpush1.msra.mxu0 %v2062
      %2194 = vmatprep.subr.mxu0 0.0
      %2195 = vmatpush1.msra.mxu0 %v2063
      %2196 = vmatprep.subr.mxu0 0.0
      %2197 = vmatpush1.msra.mxu0 %v2064
      %2198 = vmatprep.subr.mxu0 0.0
      %2199 = vmatpush1.msra.mxu0 %v2065
      %2200 = vmatprep.subr.mxu0 0.0
      %2201 = vmatpush1.msra.mxu0 %v2066
      %2202 = vmatprep.subr.mxu0 0.0
      %2203 = vmatpush1.msra.mxu0 %v2067
      %2204 = vmatprep.subr.mxu0 0.0
      %2205 = vmatpush1.msra.mxu0 %v2068
      %2206 = vmatprep.subr.mxu0 0.0
      %2207 = vmatpush1.msra.mxu0 %v2069
      %2208 = vmatprep.subr.mxu0 0.0
      %2209 = vmatpush1.msra.mxu0 %v2070
      %2210 = vmatprep.subr.mxu0 0.0
      %2211 = vmatpush1.msra.mxu0 %v2071
      %2212 = vmatprep.subr.mxu0 0.0
      %2213 = vmatpush1.msra.mxu0 %v2072
      %2214 = vmatprep.mubr.f32.mxu0 %v2008
      %2215 = vmatmul.mubr.f32.gmra.mrb[0].mxu0 %v2007
      %v2216 = vpop.f32.mrb[0].mxu0
      %v2217 = vadd.f32 %v2147, %v2216
      %v2218 = vpop.f32.mrb[0].mxu0
      %2219 = vdwg.mxu0
      %2220 = vmax.xlane.f32.xlu0 %v2217
      %v2221 = vpop.xlane.xlu0 %2220
      %v2222 = vsub.f32 %v2217, %v2221
      %v2223 = vmul.f32 %v2222, 1.442695
      %v2224 = vpow.pop %v2223
      %2225 = vadd.xlane.f32.xlu0 %v2224
      %v2226 = vpop.xlane.xlu0 %2225
      %v2227 = vrcp.pop %v2226
      %v2228 = vmul.f32 %v2224, %v2227
      %2229 = vst [vmem:[#allocation9] sm:$0xff] %v2228
    $region41: #{tpu_custom_call.1} parent=1 // pred_fallthru
      _
    // Predicated region
    $region42: #{tpu_custom_call.1} parent=1 // pred_check
      _
    $region43: #{tpu_custom_call.1} parent=1 // pred_check_branch
      %2231 = sbr.rel (0) target = $region45
    $region44: #{tpu_custom_call.1} parent=1 // pred_region
      %s2233 = ssub.s32 128, 128
      %2234 = vsyncadd [#allocation5], %s2233
      %s2236 = sshll.u32 [#allocation9], 4
      %s2237 = int_to_ptr.vmem [resolvable:$true] %s2236
      %2239 = dma.vmem_to_hbm [thread:$0]  %s2237, 128, %s5, [#allocation5]
    $region45: #{tpu_custom_call.1} parent=1 // pred_fallthru
      _
    // Predicated region
    $region46: #{tpu_custom_call.1} parent=1 // pred_check
      _
    $region47: #{tpu_custom_call.1} parent=1 // pred_check_branch
      %2241 = sbr.rel (0) target = $region49
    $region48: #{tpu_custom_call.1} parent=1 // pred_region
      %2242 = dma.done [#allocation5], 128
    $region49: #{tpu_custom_call.1} parent=1 // pred_fallthru
      _
    %2243 = vsyncpa [#allocation4], 1
    %2244 = vsyncpa [#allocation7], 1
    %2245 = vsyncpa [#allocation5], 1

</llo_original>
